<compile_context>
chip_gen: v6e
topology: v6e:2x2x1
jax: 0.10.0
libtpu: 0.0.40
codegen_flags: <defaults>
</compile_context>

<pallas_src>
import functools
import math

import jax
import jax.numpy as jnp
from jax.experimental import pallas as pl
from jax.experimental.pallas import tpu as pltpu


def _dwconv_kernel(x_ref, top_ref, bot_ref, w_ref, b_ref, o_ref, *, rows, W):
    """3x3 depthwise conv (stride 1, pad 1) on one row-strip of one batch elem.

    x_ref   : (1, rows*W, C)  centre strip tokens (row-major, flattened)
    top_ref : (1, W, C)       row directly above the strip (index clamped)
    bot_ref : (1, W, C)       row directly below the strip (index clamped)
    w_ref   : (9, C)          depthwise taps, laid out as ki*3 + kj
    b_ref   : (1, C)          bias
    o_ref   : (1, rows*W, C)  output strip
    """
    s = pl.program_id(1)
    n_strips = pl.num_programs(1)

    center = x_ref[0]                                    # (rows*W, C)
    top = top_ref[0]                                     # (W, C)
    bot = bot_ref[0]                                     # (W, C)

    # The halo index_maps clamp at the image boundary; mask those rows to zero
    # (this is the conv's zero padding in the H direction).
    top = jnp.where(s == 0, jnp.zeros_like(top), top)
    bot = jnp.where(s == n_strips - 1, jnp.zeros_like(bot), bot)

    # Halo'd strip, kept flat (token-major) so the (8, 128) tiling is intact.
    full = jnp.concatenate([top, center, bot], axis=0)   # ((rows+2)*W, C)
    full = full.astype(jnp.float32)

    # W-direction neighbours via static +/-1 shifts + boundary masks (zero
    # padding in W).  The wrap-around element lands only at col==0 / col==W-1,
    # which the masks zero out.
    T = (rows + 2) * W
    col = jax.lax.broadcasted_iota(jnp.int32, (T, 1), 0) % W
    left = jnp.where(col > 0, jnp.roll(full, 1, axis=0), 0.0)       # x[., j-1]
    right = jnp.where(col < W - 1, jnp.roll(full, -1, axis=0), 0.0)  # x[., j+1]
    horiz = (left, full, right)                          # kj = 0, 1, 2

    w = w_ref[...].astype(jnp.float32)                   # (9, C), single load
    b = b_ref[...].astype(jnp.float32)                   # (1, C)

    # out[r, j] = b + sum_{ki,kj} w[ki,kj] * padded[r + ki, j + kj - 1]
    acc = None
    for ki in range(3):
        for kj in range(3):
            idx = ki * 3 + kj
            tap = w[idx:idx + 1, :]                      # (1, C), broadcast over rows
            # Vertical neighbour: aligned whole-tile slice (start = ki*W, W % 8 == 0).
            sl = horiz[kj][ki * W:(ki + rows) * W, :]    # (rows*W, C)
            term = sl * tap
            acc = term + b if acc is None else acc + term

    o_ref[0] = acc.astype(o_ref.dtype)


def _pick_rows(H, W, Cp, itemsize, block_rows=None,
               budget_bytes=2 * 1024 * 1024, max_rows=32):
    """Largest divisor of H that keeps a strip within the byte budget."""
    if block_rows is not None:
        assert H % block_rows == 0, "block_rows must divide H"
        return block_rows
    best = 1
    for r in range(1, H + 1):
        if H % r != 0 or r > max_rows:
            continue
        if r * W * Cp * itemsize <= budget_bytes:
            best = r
    return best


def dwconv(x, dw_weight, dw_bias, H, W, *, block_rows=None):
    """Depthwise 3x3 conv (stride 1, pad 1, groups=C) over tokens.

    x:         (B, N, C) with N = H*W (row-major tokens)
    dw_weight: (9, C)    taps in ki*3 + kj order (torch weight[c, 0, ki, kj])
    dw_bias:   (C,)
    returns    (B, N, C)
    """
    B, N, C = x.shape
    assert N == H * W
    assert W % 8 == 0, "W must be a multiple of 8 for sublane-aligned halo blocks"
    # TODO(synk): support W % 8 != 0 via width padding inside the wrapper.

    # Lane-dense channels: pad to a multiple of 128.
    Cp = ((C + 127) // 128) * 128
    if Cp != C:
        x_p = jnp.pad(x, ((0, 0), (0, 0), (0, Cp - C)))
        w_p = jnp.pad(dw_weight, ((0, 0), (0, Cp - C)))
        b_p = jnp.pad(dw_bias.reshape(1, C), ((0, 0), (0, Cp - C)))
    else:
        x_p, w_p, b_p = x, dw_weight, dw_bias.reshape(1, C)

    rows = _pick_rows(H, W, Cp, x.dtype.itemsize, block_rows)
    n_strips = H // rows

    kernel = functools.partial(_dwconv_kernel, rows=rows, W=W)

    # VMEM budget: double-buffered in/out strips + halos + a few f32 temporaries.
    strip_f32 = rows * W * Cp * 4
    vmem_limit = int(min(max(12 * strip_f32, 16 * 1024 * 1024), 64 * 1024 * 1024))

    y = pl.pallas_call(
        kernel,
        out_shape=jax.ShapeDtypeStruct((B, N, Cp), x.dtype),
        grid_spec=pltpu.PrefetchScalarGridSpec(
            num_scalar_prefetch=0,
            grid=(B, n_strips),
            in_specs=[
                # centre strip: block index s along tokens (block = rows*W tokens)
                pl.BlockSpec((1, rows * W, Cp), lambda b, s: (b, s, 0)),
                # halo row above (token-axis block = one image row of W tokens)
                pl.BlockSpec((1, W, Cp),
                             lambda b, s: (b, jnp.maximum(s * rows - 1, 0), 0)),
                # halo row below
                pl.BlockSpec((1, W, Cp),
                             lambda b, s: (b, jnp.minimum((s + 1) * rows, H - 1), 0)),
                pl.BlockSpec((9, Cp), lambda b, s: (0, 0)),   # dw taps
                pl.BlockSpec((1, Cp), lambda b, s: (0, 0)),   # dw bias
            ],
            out_specs=pl.BlockSpec((1, rows * W, Cp), lambda b, s: (b, s, 0)),
        ),
        compiler_params=pltpu.CompilerParams(
            dimension_semantics=("parallel", "parallel"),
            vmem_limit_bytes=vmem_limit),
    )(x_p, x_p, x_p, w_p, b_p)

    return y[..., :C] if Cp != C else y


def _reference(x, dw_weight, dw_bias, H, W):
    """Pure-JAX reference mirroring the PyTorch DWConv forward."""
    B, N, C = x.shape
    hw = x.reshape(B, H, W, C).transpose(0, 3, 1, 2)                 # NCHW
    kern = dw_weight.reshape(3, 3, C).transpose(2, 0, 1)[:, None]    # (C, 1, 3, 3)
    conv = jax.lax.conv_general_dilated(
        hw, kern, window_strides=(1, 1), padding="SAME",
        feature_group_count=C,
        dimension_numbers=("NCHW", "OIHW", "NCHW"))
    conv = conv + dw_bias.reshape(1, C, 1, 1)
    return conv.transpose(0, 2, 3, 1).reshape(B, N, C)


if __name__ == "__main__":
    key = jax.random.PRNGKey(0)
    B, H, W = 2, 16, 16
    dim = 96                      # deliberately not a multiple of 128 (exercises padding)
    N = H * W

    ks = jax.random.split(key, 3)
    x = jax.random.normal(ks[0], (B, N, dim), jnp.float32)
    # PyTorch-style kaiming init: fan_out = 3*3*dim/dim = 9
    dww = math.sqrt(2.0 / 9.0) * jax.random.normal(ks[1], (9, dim), jnp.float32)
    dwb = 0.1 * jax.random.normal(ks[2], (dim,), jnp.float32)

    out = dwconv(x, dww, dwb, H, W, block_rows=8)   # 2 strips/batch -> halo path exercised
    out = jax.block_until_ready(out)
    assert out.shape == (B, N, dim)

    ref = _reference(x, dww, dwb, H, W)
    err = float(jnp.max(jnp.abs(out - ref)))
    assert jnp.allclose(out, ref, atol=1e-4, rtol=1e-4), err
    print("KERNEL_OK")
</pallas_src>

<mosaic_0001>
module attributes {stable_mosaic.version = 11 : i64} {
  func.func @_dwconv_kernel(%arg0: i32, %arg1: i32, %arg2: memref<1x128x128xf32, #tpu.memory_space<vmem>>, %arg3: memref<1x16x128xf32, #tpu.memory_space<vmem>>, %arg4: memref<1x16x128xf32, #tpu.memory_space<vmem>>, %arg5: memref<9x128xf32, #tpu.memory_space<vmem>>, %arg6: memref<1x128xf32, #tpu.memory_space<vmem>>, %arg7: memref<1x128x128xf32, #tpu.memory_space<vmem>>) attributes {dimension_semantics = [#tpu.dimension_semantics<parallel>, #tpu.dimension_semantics<parallel>], iteration_bounds = array<i64: 2, 2>, scalar_prefetch = 0 : i64, scratch_operands = 0 : i64, tpu.core_type = #tpu.core_type<tc>, window_params = [{transform_indices = @transform_0, window_bounds = array<i64: 1, 128, 128>}, {transform_indices = @transform_1, window_bounds = array<i64: 1, 16, 128>}, {transform_indices = @transform_2, window_bounds = array<i64: 1, 16, 128>}, {pipeline_mode = #tpu.pipeline_mode<synchronous>, transform_indices = @transform_3, window_bounds = array<i64: 9, 128>}, {pipeline_mode = #tpu.pipeline_mode<synchronous>, transform_indices = @transform_4, window_bounds = array<i64: 1, 128>}, {transform_indices = @transform_5, window_bounds = array<i64: 1, 128, 128>}]} {
    %c0 = arith.constant 0 : index
    %c0_0 = arith.constant 0 : index
    %c0_1 = arith.constant 0 : index
    %0 = vector.load %arg2[%c0, %c0_0, %c0_1] : memref<1x128x128xf32, #tpu.memory_space<vmem>>, vector<1x128x128xf32>
    %1 = vector.shape_cast %0 : vector<1x128x128xf32> to vector<128x128xf32>
    %c0_2 = arith.constant 0 : index
    %c0_3 = arith.constant 0 : index
    %c0_4 = arith.constant 0 : index
    %2 = vector.load %arg3[%c0_2, %c0_3, %c0_4] : memref<1x16x128xf32, #tpu.memory_space<vmem>>, vector<1x16x128xf32>
    %3 = vector.shape_cast %2 : vector<1x16x128xf32> to vector<16x128xf32>
    %c0_5 = arith.constant 0 : index
    %c0_6 = arith.constant 0 : index
    %c0_7 = arith.constant 0 : index
    %4 = vector.load %arg4[%c0_5, %c0_6, %c0_7] : memref<1x16x128xf32, #tpu.memory_space<vmem>>, vector<1x16x128xf32>
    %5 = vector.shape_cast %4 : vector<1x16x128xf32> to vector<16x128xf32>
    %c0_i32 = arith.constant 0 : i32
    %6 = arith.cmpi eq, %arg1, %c0_i32 : i32
    %cst = arith.constant 0.000000e+00 : f32
    %7 = vector.broadcast %cst : f32 to vector<16x128xf32>
    %8 = arith.select %6, %7, %3 : vector<16x128xf32>
    %c1_i32 = arith.constant 1 : i32
    %9 = arith.cmpi eq, %arg1, %c1_i32 : i32
    %cst_8 = arith.constant 0.000000e+00 : f32
    %10 = vector.broadcast %cst_8 : f32 to vector<16x128xf32>
    %11 = arith.select %9, %10, %5 : vector<16x128xf32>
    %12 = tpu.concatenate %8, %1, %11 in 0 : vector<16x128xf32>, vector<128x128xf32>, vector<16x128xf32> -> vector<160x128xf32>
    %13 = tpu.iota {dimensions = array<i32: 0>} : vector<160x1xi32>
    %c16_i32 = arith.constant 16 : i32
    %c0_i32_9 = arith.constant 0 : i32
    %14 = arith.cmpi eq, %c16_i32, %c0_i32_9 : i32
    %c1_i32_10 = arith.constant 1 : i32
    %15 = arith.select %14, %c1_i32_10, %c16_i32 : i32
    %16 = vector.broadcast %15 : i32 to vector<160x1xi32>
    %17 = arith.remsi %13, %16 : vector<160x1xi32>
    %c0_i32_11 = arith.constant 0 : i32
    %18 = vector.broadcast %c0_i32_11 : i32 to vector<160x1xi32>
    %19 = arith.cmpi ne, %17, %18 : vector<160x1xi32>
    %c0_i32_12 = arith.constant 0 : i32
    %20 = vector.broadcast %c0_i32_12 : i32 to vector<160x1xi32>
    %21 = arith.cmpi slt, %17, %20 : vector<160x1xi32>
    %c0_i32_13 = arith.constant 0 : i32
    %22 = arith.cmpi slt, %15, %c0_i32_13 : i32
    %23 = vector.broadcast %22 : i1 to vector<160x1xi1>
    %24 = vector.broadcast %23 : vector<160x1xi1> to vector<160x1xi1>
    %25 = arith.xori %21, %24 : vector<160x1xi1>
    %26 = arith.andi %25, %19 : vector<160x1xi1>
    %27 = vector.broadcast %15 : i32 to vector<160x1xi32>
    %28 = arith.addi %17, %27 : vector<160x1xi32>
    %29 = arith.select %26, %28, %17 : vector<160x1xi1>, vector<160x1xi32>
    %c0_i32_14 = arith.constant 0 : i32
    %30 = vector.broadcast %c0_i32_14 : i32 to vector<160x1xi32>
    %31 = arith.cmpi sgt, %29, %30 : vector<160x1xi32>
    %32 = vector.extract_strided_slice %12 {offsets = [159, 0], sizes = [1, 128], strides = [1, 1]} : vector<160x128xf32> to vector<1x128xf32>
    %33 = vector.extract_strided_slice %12 {offsets = [0, 0], sizes = [159, 128], strides = [1, 1]} : vector<160x128xf32> to vector<159x128xf32>
    %34 = tpu.concatenate %32, %33 in 0 : vector<1x128xf32>, vector<159x128xf32> -> vector<160x128xf32>
    %cst_15 = arith.constant 0.000000e+00 : f32
    %35 = vector.shape_cast %31 : vector<160x1xi1> to vector<160x1xi1>
    %36 = vector.broadcast %35 : vector<160x1xi1> to vector<160x128xi1>
    %37 = vector.broadcast %cst_15 : f32 to vector<160x128xf32>
    %38 = arith.select %36, %34, %37 : vector<160x128xi1>, vector<160x128xf32>
    %c15_i32 = arith.constant 15 : i32
    %39 = vector.broadcast %c15_i32 : i32 to vector<160x1xi32>
    %40 = arith.cmpi slt, %29, %39 : vector<160x1xi32>
    %41 = vector.extract_strided_slice %12 {offsets = [1, 0], sizes = [159, 128], strides = [1, 1]} : vector<160x128xf32> to vector<159x128xf32>
    %42 = vector.extract_strided_slice %12 {offsets = [0, 0], sizes = [1, 128], strides = [1, 1]} : vector<160x128xf32> to vector<1x128xf32>
    %43 = tpu.concatenate %41, %42 in 0 : vector<159x128xf32>, vector<1x128xf32> -> vector<160x128xf32>
    %cst_16 = arith.constant 0.000000e+00 : f32
    %44 = vector.shape_cast %40 : vector<160x1xi1> to vector<160x1xi1>
    %45 = vector.broadcast %44 : vector<160x1xi1> to vector<160x128xi1>
    %46 = vector.broadcast %cst_16 : f32 to vector<160x128xf32>
    %47 = arith.select %45, %43, %46 : vector<160x128xi1>, vector<160x128xf32>
    %c0_17 = arith.constant 0 : index
    %c0_18 = arith.constant 0 : index
    %48 = vector.load %arg5[%c0_17, %c0_18] : memref<9x128xf32, #tpu.memory_space<vmem>>, vector<9x128xf32>
    %c0_19 = arith.constant 0 : index
    %c0_20 = arith.constant 0 : index
    %49 = vector.load %arg6[%c0_19, %c0_20] : memref<1x128xf32, #tpu.memory_space<vmem>>, vector<1x128xf32>
    %50 = vector.extract_strided_slice %48 {offsets = [0, 0], sizes = [1, 128], strides = [1, 1]} : vector<9x128xf32> to vector<1x128xf32>
    %51 = vector.extract_strided_slice %38 {offsets = [0, 0], sizes = [128, 128], strides = [1, 1]} : vector<160x128xf32> to vector<128x128xf32>
    %52 = vector.broadcast %50 : vector<1x128xf32> to vector<128x128xf32>
    %53 = arith.mulf %51, %52 : vector<128x128xf32>
    %54 = vector.broadcast %49 : vector<1x128xf32> to vector<128x128xf32>
    %55 = arith.addf %53, %54 : vector<128x128xf32>
    %56 = vector.extract_strided_slice %48 {offsets = [1, 0], sizes = [1, 128], strides = [1, 1]} : vector<9x128xf32> to vector<1x128xf32>
    %57 = vector.extract_strided_slice %12 {offsets = [0, 0], sizes = [128, 128], strides = [1, 1]} : vector<160x128xf32> to vector<128x128xf32>
    %58 = vector.broadcast %56 : vector<1x128xf32> to vector<128x128xf32>
    %59 = arith.mulf %57, %58 : vector<128x128xf32>
    %60 = arith.addf %55, %59 : vector<128x128xf32>
    %61 = vector.extract_strided_slice %48 {offsets = [2, 0], sizes = [1, 128], strides = [1, 1]} : vector<9x128xf32> to vector<1x128xf32>
    %62 = vector.extract_strided_slice %47 {offsets = [0, 0], sizes = [128, 128], strides = [1, 1]} : vector<160x128xf32> to vector<128x128xf32>
    %63 = vector.broadcast %61 : vector<1x128xf32> to vector<128x128xf32>
    %64 = arith.mulf %62, %63 : vector<128x128xf32>
    %65 = arith.addf %60, %64 : vector<128x128xf32>
    %66 = vector.extract_strided_slice %48 {offsets = [3, 0], sizes = [1, 128], strides = [1, 1]} : vector<9x128xf32> to vector<1x128xf32>
    %67 = vector.extract_strided_slice %38 {offsets = [16, 0], sizes = [128, 128], strides = [1, 1]} : vector<160x128xf32> to vector<128x128xf32>
    %68 = vector.broadcast %66 : vector<1x128xf32> to vector<128x128xf32>
    %69 = arith.mulf %67, %68 : vector<128x128xf32>
    %70 = arith.addf %65, %69 : vector<128x128xf32>
    %71 = vector.extract_strided_slice %48 {offsets = [4, 0], sizes = [1, 128], strides = [1, 1]} : vector<9x128xf32> to vector<1x128xf32>
    %72 = vector.extract_strided_slice %12 {offsets = [16, 0], sizes = [128, 128], strides = [1, 1]} : vector<160x128xf32> to vector<128x128xf32>
    %73 = vector.broadcast %71 : vector<1x128xf32> to vector<128x128xf32>
    %74 = arith.mulf %72, %73 : vector<128x128xf32>
    %75 = arith.addf %70, %74 : vector<128x128xf32>
    %76 = vector.extract_strided_slice %48 {offsets = [5, 0], sizes = [1, 128], strides = [1, 1]} : vector<9x128xf32> to vector<1x128xf32>
    %77 = vector.extract_strided_slice %47 {offsets = [16, 0], sizes = [128, 128], strides = [1, 1]} : vector<160x128xf32> to vector<128x128xf32>
    %78 = vector.broadcast %76 : vector<1x128xf32> to vector<128x128xf32>
    %79 = arith.mulf %77, %78 : vector<128x128xf32>
    %80 = arith.addf %75, %79 : vector<128x128xf32>
    %81 = vector.extract_strided_slice %48 {offsets = [6, 0], sizes = [1, 128], strides = [1, 1]} : vector<9x128xf32> to vector<1x128xf32>
    %82 = vector.extract_strided_slice %38 {offsets = [32, 0], sizes = [128, 128], strides = [1, 1]} : vector<160x128xf32> to vector<128x128xf32>
    %83 = vector.broadcast %81 : vector<1x128xf32> to vector<128x128xf32>
    %84 = arith.mulf %82, %83 : vector<128x128xf32>
    %85 = arith.addf %80, %84 : vector<128x128xf32>
    %86 = vector.extract_strided_slice %48 {offsets = [7, 0], sizes = [1, 128], strides = [1, 1]} : vector<9x128xf32> to vector<1x128xf32>
    %87 = vector.extract_strided_slice %12 {offsets = [32, 0], sizes = [128, 128], strides = [1, 1]} : vector<160x128xf32> to vector<128x128xf32>
    %88 = vector.broadcast %86 : vector<1x128xf32> to vector<128x128xf32>
    %89 = arith.mulf %87, %88 : vector<128x128xf32>
    %90 = arith.addf %85, %89 : vector<128x128xf32>
    %91 = vector.extract_strided_slice %48 {offsets = [8, 0], sizes = [1, 128], strides = [1, 1]} : vector<9x128xf32> to vector<1x128xf32>
    %92 = vector.extract_strided_slice %47 {offsets = [32, 0], sizes = [128, 128], strides = [1, 1]} : vector<160x128xf32> to vector<128x128xf32>
    %93 = vector.broadcast %91 : vector<1x128xf32> to vector<128x128xf32>
    %94 = arith.mulf %92, %93 : vector<128x128xf32>
    %95 = arith.addf %90, %94 : vector<128x128xf32>
    %c0_21 = arith.constant 0 : index
    %c0_22 = arith.constant 0 : index
    %c0_23 = arith.constant 0 : index
    %96 = vector.load %arg7[%c0_21, %c0_22, %c0_23] : memref<1x128x128xf32, #tpu.memory_space<vmem>>, vector<1x128x128xf32>
    %97 = vector.shape_cast %96 : vector<1x128x128xf32> to vector<128x128xf32>
    %98 = vector.shape_cast %95 : vector<128x128xf32> to vector<1x128x128xf32>
    tpu.vector_store %arg7[%c0_21, %c0_22, %c0_23], %98 {strides = array<i32>} : memref<1x128x128xf32, #tpu.memory_space<vmem>>, vector<1x128x128xf32>,
    return
  }
  func.func @transform_0(%arg0: i32, %arg1: i32) -> (i32, i32, i32) {
    %c0_i32 = arith.constant 0 : i32
    %c0_i32_0 = arith.constant 0 : i32
    return %arg0, %arg1, %c0_i32 : i32, i32, i32
  }
  func.func @transform_1(%arg0: i32, %arg1: i32) -> (i32, i32, i32) {
    %c8_i32 = arith.constant 8 : i32
    %0 = arith.muli %arg1, %c8_i32 : i32
    %c1_i32 = arith.constant 1 : i32
    %1 = arith.subi %0, %c1_i32 : i32
    %c0_i32 = arith.constant 0 : i32
    %2 = arith.maxsi %1, %c0_i32 : i32
    %c0_i32_0 = arith.constant 0 : i32
    %c0_i32_1 = arith.constant 0 : i32
    return %arg0, %2, %c0_i32_0 : i32, i32, i32
  }
  func.func @transform_2(%arg0: i32, %arg1: i32) -> (i32, i32, i32) {
    %c1_i32 = arith.constant 1 : i32
    %0 = arith.addi %arg1, %c1_i32 : i32
    %c8_i32 = arith.constant 8 : i32
    %1 = arith.muli %0, %c8_i32 : i32
    %c15_i32 = arith.constant 15 : i32
    %2 = arith.minsi %1, %c15_i32 : i32
    %c0_i32 = arith.constant 0 : i32
    %c0_i32_0 = arith.constant 0 : i32
    return %arg0, %2, %c0_i32 : i32, i32, i32
  }
  func.func @transform_3(%arg0: i32, %arg1: i32) -> (i32, i32) {
    %c0_i32 = arith.constant 0 : i32
    %c0_i32_0 = arith.constant 0 : i32
    %c0_i32_1 = arith.constant 0 : i32
    return %c0_i32, %c0_i32_0 : i32, i32
  }
  func.func @transform_4(%arg0: i32, %arg1: i32) -> (i32, i32) {
    %c0_i32 = arith.constant 0 : i32
    %c0_i32_0 = arith.constant 0 : i32
    %c0_i32_1 = arith.constant 0 : i32
    return %c0_i32, %c0_i32_0 : i32, i32
  }
  func.func @transform_5(%arg0: i32, %arg1: i32) -> (i32, i32, i32) {
    %c0_i32 = arith.constant 0 : i32
    %c0_i32_0 = arith.constant 0 : i32
    return %arg0, %arg1, %c0_i32 : i32, i32, i32
  }
}

</mosaic_0001>

<llo_original>
// kernel: tpu_custom_call.1
$region0: #{tpu_custom_call.1}
  #allocation0 [shape = 'u32[]', space=smem, size = 0x4, offset = 0x4, fixed_abs, tag = 'smem constant byte address 0x4 - core index']
  #allocation1 [shape = 'u32[144,128]{1,0:T(1,128)}', space=vmem, size = 0x12000, scoped, tag = 'internal scratch']
  %s0 = inlined_call_operand.hbm [shape: f32[2,256,128], index: 0, kind: input, shape index: {}]
  %s1 = inlined_call_operand.hbm [shape: f32[2,256,128], index: 1, kind: input, shape index: {}]
  %s2 = inlined_call_operand.hbm [shape: f32[2,256,128], index: 2, kind: input, shape index: {}]
  %s3 = inlined_call_operand.hbm [shape: f32[9,128], index: 3, kind: input, shape index: {}]
  %s4 = inlined_call_operand.vmem [shape: f32[1,128], index: 4, kind: input, shape index: {}]
  %s5 = inlined_call_operand.hbm [shape: f32[2,256,128], index: 5, kind: output, shape index: {}]
  %s6 = sld [smem:[#allocation0]]
  $region69: #{tpu_custom_call.1} parent=0
    _
  %s8 = ssub.s32 1, %s6
  %s9 = scalar_select 0, %s8, %s6
  $region1: #{tpu_custom_call.1} parent=0
    #allocation2 [shape = 'u8[131072]{0}', space=vmem, size = 0x20000, scoped, tag = 'input window, operand 0']
    #allocation3 [shape = 's32[2]{0}', space=sflag, size = 0x8, scoped, tag = 'scoped memory for tpu_custom_call.1']
    #allocation4 [shape = 's32[2]{0}', space=sflag, size = 0x8, scoped, tag = 'scoped memory for tpu_custom_call.1']
    #allocation5 [shape = 'u8[16384]{0}', space=vmem, size = 0x4000, scoped, tag = 'input window, operand 1']
    #allocation6 [shape = 's32[2]{0}', space=sflag, size = 0x8, scoped, tag = 'scoped memory for tpu_custom_call.1']
    #allocation7 [shape = 'u8[16384]{0}', space=vmem, size = 0x4000, scoped, tag = 'input window, operand 2']
    #allocation8 [shape = 'u8[8192]{0}', space=vmem, size = 0x2000, scoped, tag = 'input window, operand 3, single buffered']
    #allocation9 [shape = 's32[1]{0}', space=sflag, size = 0x4, scoped, tag = 'scoped memory for tpu_custom_call.1']
    #allocation10 [shape = 'u8[131072]{0}', space=vmem, size = 0x20000, scoped, tag = 'output window, operand 0']
    %10 = vsyncpa [#allocation3], 0
    %s11 = scalar_lea.sflag [#allocation3], 1
    %12 = vsyncpa %s11, 0
    %13 = vsyncpa [#allocation6], 0
    %s14 = scalar_lea.sflag [#allocation6], 1
    %15 = vsyncpa %s14, 0
    %16 = vsyncpa [#allocation9], 0
    %17 = vsyncpa [#allocation4], 0
    %s18 = scalar_lea.sflag [#allocation4], 1
    %19 = vsyncpa %s18, 0
    loop: start=0, step=1, limit=6
    $region2: #{tpu_custom_call.1} parent=1 // loop_pre_header
      _
    $region3: #{tpu_custom_call.1} parent=1 // loop_header
      %s21 = sphi 0, %s25
      %p22 = scmp.ge.s32.totalorder %s21, 6
      %s28 = sphi 0, %s40
      %s29 = sphi 0, %s36
      %s30 = sphi 0, %s28
      %s31 = sphi 0, %s29
      %s32 = sphi 0, %s30
      %s33 = sphi 0, %s31
      %s45 = sphi 0, %s47
      %s48 = sphi 0, %s45
      %s49 = sphi 0, %s48
      %s65 = sphi 0, %s49
      %s81 = sphi 0, %s83
      %s84 = sphi 0, %s81
      %s85 = sphi 0, %s84
      %s101 = sphi 0, %s85
      %s117 = sphi 0, %s119
      %s120 = sphi 0, %s117
      %s121 = sphi 0, %s120
      %s137 = sphi 0, %s121
      %s141 = sphi 0, %s141
      %s143 = sphi 0, %s141
      %s144 = sphi 0, %s143
      %s158 = sphi 0, %s144
      %s162 = sphi 0, %s162
      %s164 = sphi 0, %s162
      %s165 = sphi 0, %s164
      %s179 = sphi 0, %s165
      %s187 = sphi 0, %s189
      %s190 = sphi 0, %s187
      %s191 = sphi 0, %s190
      %s207 = sphi 0, %s191
    $region4: #{tpu_custom_call.1} parent=1 // loop_header_branch
      %24 = sbr.rel (%p22) target = $region8
    $region5: #{tpu_custom_call.1} parent=1 // loop_body
      %s26 = ssub.s32 %s21, 1
      %s27 = ssub.s32 %s21, 2
      %s34 = sadd.s32 1, %s29
      %p35 = scmp.ge.s32.totalorder %s34, 2
      %s36 = scalar_select %p35, 0, %s34
      %s37 = sadd.s32 1, %s28
      %s38 = scalar_select %p35, %s37, %s28
      %p39 = scmp.ge.s32.totalorder %s38, 2
      %s40 = scalar_select %p39, 0, %s38
      %s41 = ssub.s32 %s28, %s40
      %s42 = ssub.s32 %s29, %s36
      %s43 = sor.u32 %s41, %s42
      %p44 = scmp.eq.s32.totalorder %s43, 0
      %s46 = sadd.s32 %s45, 1
      %s47 = scalar_select %p44, %s45, %s46
      %p50 = pneg %p44
      %p51 = scmp.eq.s32.totalorder %s21, 3
      %p52 = por %p50, %p51
      %p53 = scmp.ne.s32.totalorder %s45, %s48
      %p54 = scmp.eq.s32.totalorder %s21, 0
      %p55 = por %p53, %p54
      %p56 = scmp.ne.s32.totalorder %s45, %s48
      %p57 = scmp.eq.s32.totalorder %s26, 3
      %p58 = por %p56, %p57
      %p59 = scmp.ne.s32.totalorder %s48, %s49
      %p60 = scmp.eq.s32.totalorder %s26, 0
      %p61 = por %p59, %p60
      %p62 = scmp.ne.s32.totalorder %s48, %s49
      %p63 = scmp.eq.s32.totalorder %s27, 3
      %p64 = por %p62, %p63
      %p66 = scmp.ne.s32.totalorder %s49, %s65
      %p67 = scmp.eq.s32.totalorder %s27, 0
      %p68 = por %p66, %p67
      %s69 = smul.u32 %s29, 8
      %s70 = ssub.s32 %s69, 1
      %p71 = scmp.gt.s32.totalorder %s70, 0
      %s72 = scalar_select %p71, %s70, 0
      %s73 = smul.u32 %s36, 8
      %s74 = ssub.s32 %s73, 1
      %p75 = scmp.gt.s32.totalorder %s74, 0
      %s76 = scalar_select %p75, %s74, 0
      %s77 = ssub.s32 %s28, %s40
      %s78 = ssub.s32 %s72, %s76
      %s79 = sor.u32 %s77, %s78
      %p80 = scmp.eq.s32.totalorder %s79, 0
      %s82 = sadd.s32 %s81, 1
      %s83 = scalar_select %p80, %s81, %s82
      %p86 = pneg %p80
      %p87 = scmp.eq.s32.totalorder %s21, 3
      %p88 = por %p86, %p87
      %p89 = scmp.ne.s32.totalorder %s81, %s84
      %p90 = scmp.eq.s32.totalorder %s21, 0
      %p91 = por %p89, %p90
      %p92 = scmp.ne.s32.totalorder %s81, %s84
      %p93 = scmp.eq.s32.totalorder %s26, 3
      %p94 = por %p92, %p93
      %p95 = scmp.ne.s32.totalorder %s84, %s85
      %p96 = scmp.eq.s32.totalorder %s26, 0
      %p97 = por %p95, %p96
      %p98 = scmp.ne.s32.totalorder %s84, %s85
      %p99 = scmp.eq.s32.totalorder %s27, 3
      %p100 = por %p98, %p99
      %p102 = scmp.ne.s32.totalorder %s85, %s101
      %p103 = scmp.eq.s32.totalorder %s27, 0
      %p104 = por %p102, %p103
      %s105 = sadd.s32 %s29, 1
      %s106 = smul.u32 %s105, 8
      %p107 = scmp.lt.s32.totalorder %s106, 15
      %s108 = scalar_select %p107, %s106, 15
      %s109 = sadd.s32 %s36, 1
      %s110 = smul.u32 %s109, 8
      %p111 = scmp.lt.s32.totalorder %s110, 15
      %s112 = scalar_select %p111, %s110, 15
      %s113 = ssub.s32 %s28, %s40
      %s114 = ssub.s32 %s108, %s112
      %s115 = sor.u32 %s113, %s114
      %p116 = scmp.eq.s32.totalorder %s115, 0
      %s118 = sadd.s32 %s117, 1
      %s119 = scalar_select %p116, %s117, %s118
      %p122 = pneg %p116
      %p123 = scmp.eq.s32.totalorder %s21, 3
      %p124 = por %p122, %p123
      %p125 = scmp.ne.s32.totalorder %s117, %s120
      %p126 = scmp.eq.s32.totalorder %s21, 0
      %p127 = por %p125, %p126
      %p128 = scmp.ne.s32.totalorder %s117, %s120
      %p129 = scmp.eq.s32.totalorder %s26, 3
      %p130 = por %p128, %p129
      %p131 = scmp.ne.s32.totalorder %s120, %s121
      %p132 = scmp.eq.s32.totalorder %s26, 0
      %p133 = por %p131, %p132
      %p134 = scmp.ne.s32.totalorder %s120, %s121
      %p135 = scmp.eq.s32.totalorder %s27, 3
      %p136 = por %p134, %p135
      %p138 = scmp.ne.s32.totalorder %s121, %s137
      %p139 = scmp.eq.s32.totalorder %s27, 0
      %p140 = por %p138, %p139
      %s142 = sadd.s32 %s141, 1
      %p145 = scmp.eq.s32.totalorder %s21, 3
      %p146 = scmp.ne.s32.totalorder %s141, %s143
      %p147 = scmp.eq.s32.totalorder %s21, 0
      %p148 = por %p146, %p147
      %p149 = scmp.ne.s32.totalorder %s141, %s143
      %p150 = scmp.eq.s32.totalorder %s26, 3
      %p151 = por %p149, %p150
      %p152 = scmp.ne.s32.totalorder %s143, %s144
      %p153 = scmp.eq.s32.totalorder %s26, 0
      %p154 = por %p152, %p153
      %p155 = scmp.ne.s32.totalorder %s143, %s144
      %p156 = scmp.eq.s32.totalorder %s27, 3
      %p157 = por %p155, %p156
      %p159 = scmp.ne.s32.totalorder %s144, %s158
      %p160 = scmp.eq.s32.totalorder %s27, 0
      %p161 = por %p159, %p160
      %s163 = sadd.s32 %s162, 1
      %p166 = scmp.eq.s32.totalorder %s21, 3
      %p167 = scmp.ne.s32.totalorder %s162, %s164
      %p168 = scmp.eq.s32.totalorder %s21, 0
      %p169 = por %p167, %p168
      %p170 = scmp.ne.s32.totalorder %s162, %s164
      %p171 = scmp.eq.s32.totalorder %s26, 3
      %p172 = por %p170, %p171
      %p173 = scmp.ne.s32.totalorder %s164, %s165
      %p174 = scmp.eq.s32.totalorder %s26, 0
      %p175 = por %p173, %p174
      %p176 = scmp.ne.s32.totalorder %s164, %s165
      %p177 = scmp.eq.s32.totalorder %s27, 3
      %p178 = por %p176, %p177
      %p180 = scmp.ne.s32.totalorder %s165, %s179
      %p181 = scmp.eq.s32.totalorder %s27, 0
      %p182 = por %p180, %p181
      %s183 = ssub.s32 %s28, %s40
      %s184 = ssub.s32 %s29, %s36
      %s185 = sor.u32 %s183, %s184
      %p186 = scmp.eq.s32.totalorder %s185, 0
      %s188 = sadd.s32 %s187, 1
      %s189 = scalar_select %p186, %s187, %s188
      %p192 = pneg %p186
      %p193 = scmp.eq.s32.totalorder %s21, 3
      %p194 = por %p192, %p193
      %p195 = scmp.ne.s32.totalorder %s187, %s190
      %p196 = scmp.eq.s32.totalorder %s21, 0
      %p197 = por %p195, %p196
      %p198 = scmp.ne.s32.totalorder %s187, %s190
      %p199 = scmp.eq.s32.totalorder %s26, 3
      %p200 = por %p198, %p199
      %p201 = scmp.ne.s32.totalorder %s190, %s191
      %p202 = scmp.eq.s32.totalorder %s26, 0
      %p203 = por %p201, %p202
      %p204 = scmp.ne.s32.totalorder %s190, %s191
      %p205 = scmp.eq.s32.totalorder %s27, 3
      %p206 = por %p204, %p205
      %p208 = scmp.ne.s32.totalorder %s191, %s207
      %p209 = scmp.eq.s32.totalorder %s27, 0
      %p210 = por %p208, %p209
      %p211 = scmp.le.s32.totalorder 1, %s21
      %p212 = scmp.lt.s32.totalorder %s21, 5
      %p213 = pnand %p211, %p212
      %p214 = pneg %p213
      // Predicated region
      $region9: #{tpu_custom_call.1} parent=5 // pred_check
        _
      $region10: #{tpu_custom_call.1} parent=5 // pred_check_branch
        %216 = sbr.rel (%p213) target = $region12
      $region11: #{tpu_custom_call.1} parent=5 // pred_region
        %s217 = ssub.s32 %s21, 1
        // Predicated region
        $region13: #{tpu_custom_call.1} parent=11 // pred_check
          %p218 = pneg %p154
        $region14: #{tpu_custom_call.1} parent=11 // pred_check_branch
          %220 = sbr.rel (%p218) target = $region16
        $region15: #{tpu_custom_call.1} parent=11 // pred_region
          %s222 = ssub.s32 256, 256
          %223 = vsyncadd [#allocation9], %s222
          %s224 = sshll.u32 [#allocation8], 4
          %s225 = int_to_ptr.vmem [resolvable:$true] %s224
          %230 = dma.hbm_to_vmem [thread:$0]  %s3, 256, %s225, [#allocation9], 128, 128, 8
        $region16: #{tpu_custom_call.1} parent=11 // pred_fallthru
          _
        // Predicated region
        $region17: #{tpu_custom_call.1} parent=11 // pred_check
          %p231 = pneg %p175
        $region18: #{tpu_custom_call.1} parent=11 // pred_check_branch
          %233 = sbr.rel (%p231) target = $region20
        $region19: #{tpu_custom_call.1} parent=11 // pred_region
          _
        $region20: #{tpu_custom_call.1} parent=11 // pred_fallthru
          _
      $region12: #{tpu_custom_call.1} parent=5 // pred_fallthru
        _
      %p234 = scmp.lt.s32.totalorder %s21, 4
      // Predicated region
      $region21: #{tpu_custom_call.1} parent=5 // pred_check
        %p235 = pneg %p234
      $region22: #{tpu_custom_call.1} parent=5 // pred_check_branch
        %237 = sbr.rel (%p235) target = $region24
      $region23: #{tpu_custom_call.1} parent=5 // pred_region
        // Predicated region
        $region25: #{tpu_custom_call.1} parent=23 // pred_check
          %p238 = pneg %p55
        $region26: #{tpu_custom_call.1} parent=23 // pred_check_branch
          %240 = sbr.rel (%p238) target = $region28
        $region27: #{tpu_custom_call.1} parent=23 // pred_region
          %s241 = sand.u32 %s45, 1
          %s242 = scalar_lea.sflag [#allocation3], %s241
          %s243 = sand.u32 %s45, 1
          %s244 = smul.addr %s243, 128
          %s245 = scalar_lea.vmem [#allocation2], %s244
          %s246 = smul.u32 16, %s29
          %s248 = ssub.s32 2048, 2048
          %249 = vsyncadd %s242, %s248
          %s250 = smul.addr %s28, 32
          %s251 = sadd.s32 %s246, %s250
          %s252 = smul.addr %s251, 128
          %s253 = scalar_lea.hbm %s0, %s252
          %s254 = sshll.u32 %s245, 4
          %s255 = int_to_ptr.vmem [resolvable:$true] %s254
          %260 = dma.hbm_to_vmem [thread:$0]  %s253, 2048, %s255, %s242, 128, 128, 8
        $region28: #{tpu_custom_call.1} parent=23 // pred_fallthru
          _
        // Predicated region
        $region29: #{tpu_custom_call.1} parent=23 // pred_check
          %p261 = pneg %p91
        $region30: #{tpu_custom_call.1} parent=23 // pred_check_branch
          %263 = sbr.rel (%p261) target = $region32
        $region31: #{tpu_custom_call.1} parent=23 // pred_region
          %s264 = sand.u32 %s21, 1
          %s265 = scalar_lea.sflag [#allocation6], %s264
          %s266 = sand.u32 %s81, 1
          %s267 = smul.addr %s266, 16
          %s268 = scalar_lea.vmem [#allocation5], %s267
          %s269 = smul.u32 %s29, 8
          %s270 = ssub.s32 %s269, 1
          %p271 = scmp.gt.s32.totalorder %s270, 0
          %s272 = scalar_select %p271, %s270, 0
          %s273 = smul.u32 2, %s272
          %s275 = ssub.s32 256, 256
          %276 = vsyncadd %s265, %s275
          %s277 = smul.addr %s28, 32
          %s278 = sadd.s32 %s273, %s277
          %s279 = smul.addr %s278, 128
          %s280 = scalar_lea.hbm %s1, %s279
          %s281 = sshll.u32 %s268, 4
          %s282 = int_to_ptr.vmem [resolvable:$true] %s281
          %287 = dma.hbm_to_vmem [thread:$0]  %s280, 256, %s282, %s265, 128, 128, 8
        $region32: #{tpu_custom_call.1} parent=23 // pred_fallthru
          _
        // Predicated region
        $region33: #{tpu_custom_call.1} parent=23 // pred_check
          %p288 = pneg %p127
        $region34: #{tpu_custom_call.1} parent=23 // pred_check_branch
          %290 = sbr.rel (%p288) target = $region36
        $region35: #{tpu_custom_call.1} parent=23 // pred_region
          %s291 = sand.u32 %s21, 1
          %s292 = scalar_lea.sflag [#allocation6], %s291
          %s293 = sand.u32 %s117, 1
          %s294 = smul.addr %s293, 16
          %s295 = scalar_lea.vmem [#allocation7], %s294
          %s296 = sadd.s32 %s29, 1
          %s297 = smul.u32 %s296, 8
          %p298 = scmp.lt.s32.totalorder %s297, 15
          %s299 = scalar_select %p298, %s297, 15
          %s300 = smul.u32 2, %s299
          %s302 = ssub.s32 256, 256
          %303 = vsyncadd %s292, %s302
          %s304 = smul.addr %s28, 32
          %s305 = sadd.s32 %s300, %s304
          %s306 = smul.addr %s305, 128
          %s307 = scalar_lea.hbm %s2, %s306
          %s308 = sshll.u32 %s295, 4
          %s309 = int_to_ptr.vmem [resolvable:$true] %s308
          %314 = dma.hbm_to_vmem [thread:$0]  %s307, 256, %s309, %s292, 128, 128, 8
        $region36: #{tpu_custom_call.1} parent=23 // pred_fallthru
          _
      $region24: #{tpu_custom_call.1} parent=5 // pred_fallthru
        _
      %p315 = scmp.le.s32.totalorder 1, %s21
      %p316 = scmp.lt.s32.totalorder %s21, 5
      %p317 = pnand %p315, %p316
      %p318 = pneg %p317
      // Predicated region
      $region37: #{tpu_custom_call.1} parent=5 // pred_check
        _
      $region38: #{tpu_custom_call.1} parent=5 // pred_check_branch
        %320 = sbr.rel (%p317) target = $region40
      $region39: #{tpu_custom_call.1} parent=5 // pred_region
        %s321 = ssub.s32 %s21, 1
        %s322 = sand.u32 %s48, 1
        %s323 = scalar_lea.sflag [#allocation3], %s322
        %s324 = sand.u32 %s48, 1
        %s325 = smul.addr %s324, 128
        %s326 = scalar_lea.vmem [#allocation2], %s325
        // Predicated region
        $region41: #{tpu_custom_call.1} parent=39 // pred_check
          %p327 = pneg %p61
        $region42: #{tpu_custom_call.1} parent=39 // pred_check_branch
          %329 = sbr.rel (%p327) target = $region44
        $region43: #{tpu_custom_call.1} parent=39 // pred_region
          %330 = dma.done %s323, 2048
        $region44: #{tpu_custom_call.1} parent=39 // pred_fallthru
          _
        %s331 = sand.u32 %s26, 1
        %s332 = scalar_lea.sflag [#allocation6], %s331
        %s333 = sand.u32 %s84, 1
        %s334 = smul.addr %s333, 16
        %s335 = scalar_lea.vmem [#allocation5], %s334
        // Predicated region
        $region45: #{tpu_custom_call.1} parent=39 // pred_check
          %p336 = pneg %p97
        $region46: #{tpu_custom_call.1} parent=39 // pred_check_branch
          %338 = sbr.rel (%p336) target = $region48
        $region47: #{tpu_custom_call.1} parent=39 // pred_region
          %339 = dma.done %s332, 256
        $region48: #{tpu_custom_call.1} parent=39 // pred_fallthru
          _
        %s340 = sand.u32 %s26, 1
        %s341 = scalar_lea.sflag [#allocation6], %s340
        %s342 = sand.u32 %s120, 1
        %s343 = smul.addr %s342, 16
        %s344 = scalar_lea.vmem [#allocation7], %s343
        // Predicated region
        $region49: #{tpu_custom_call.1} parent=39 // pred_check
          %p345 = pneg %p133
        $region50: #{tpu_custom_call.1} parent=39 // pred_check_branch
          %347 = sbr.rel (%p345) target = $region52
        $region51: #{tpu_custom_call.1} parent=39 // pred_region
          %348 = dma.done %s341, 256
        $region52: #{tpu_custom_call.1} parent=39 // pred_fallthru
          _
        // Predicated region
        $region53: #{tpu_custom_call.1} parent=39 // pred_check
          %p349 = pneg %p154
        $region54: #{tpu_custom_call.1} parent=39 // pred_check_branch
          %351 = sbr.rel (%p349) target = $region56
        $region55: #{tpu_custom_call.1} parent=39 // pred_region
          %352 = dma.done [#allocation9], 256
        $region56: #{tpu_custom_call.1} parent=39 // pred_fallthru
          _
        %s353 = sand.u32 %s48, 1
        %s354 = scalar_lea.sflag [#allocation3], %s353
        %s355 = sand.u32 %s48, 1
        %s356 = smul.addr %s355, 128
        %s357 = scalar_lea.vmem [#allocation2], %s356
        %p358 = pneg %p61
        %p359 = pneg %p58
        %s360 = sand.u32 %s26, 1
        %s361 = scalar_lea.sflag [#allocation6], %s360
        %s362 = sand.u32 %s84, 1
        %s363 = smul.addr %s362, 16
        %s364 = scalar_lea.vmem [#allocation5], %s363
        %p365 = pneg %p97
        %p366 = pneg %p94
        %s367 = sand.u32 %s26, 1
        %s368 = scalar_lea.sflag [#allocation6], %s367
        %s369 = sand.u32 %s120, 1
        %s370 = smul.addr %s369, 16
        %s371 = scalar_lea.vmem [#allocation7], %s370
        %p372 = pneg %p133
        %p373 = pneg %p130
        %p374 = pneg %p154
        %p375 = pneg %p151
        %p376 = pneg %p175
        %p377 = pneg %p172
        %p378 = pneg %p203
        %p379 = pneg %p200
        %s380 = sand.u32 %s190, 1
        %s381 = scalar_lea.sflag [#allocation4], %s380
        %s382 = sand.u32 %s190, 1
        %s383 = smul.addr %s382, 128
        %s384 = scalar_lea.vmem [#allocation10], %s383
        %s385 = smul.u32 16, %s31
        %s386 = smul.u32 %s31, 8
        %s387 = ssub.s32 %s386, 1
        %p388 = scmp.gt.s32.totalorder %s387, 0
        %s389 = scalar_select %p388, %s387, 0
        %s390 = smul.u32 2, %s389
        %s391 = sadd.s32 %s31, 1
        %s392 = smul.u32 %s391, 8
        %p393 = scmp.lt.s32.totalorder %s392, 15
        %s394 = scalar_select %p393, %s392, 15
        %s395 = smul.u32 2, %s394
        %s396 = smul.u32 16, %s31
        %v397 = vld [vmem:[%s326] sm:$0xff]
        %v398 = vld [vmem:[%s326 + $0x8] sm:$0xff]
        %v399 = vld [vmem:[%s326 + $0x10] sm:$0xff]
        %v400 = vld [vmem:[%s326 + $0x18] sm:$0xff]
        %v401 = vld [vmem:[%s326 + $0x20] sm:$0xff]
        %v402 = vld [vmem:[%s326 + $0x28] sm:$0xff]
        %v403 = vld [vmem:[%s326 + $0x30] sm:$0xff]
        %v404 = vld [vmem:[%s326 + $0x38] sm:$0xff]
        %v405 = vld [vmem:[%s326 + $0x40] sm:$0xff]
        %v406 = vld [vmem:[%s326 + $0x48] sm:$0xff]
        %v407 = vld [vmem:[%s326 + $0x50] sm:$0xff]
        %v408 = vld [vmem:[%s326 + $0x58] sm:$0xff]
        %v409 = vld [vmem:[%s326 + $0x60] sm:$0xff]
        %v410 = vld [vmem:[%s326 + $0x68] sm:$0xff]
        %v411 = vld [vmem:[%s326 + $0x70] sm:$0xff]
        %v412 = vld [vmem:[%s326 + $0x78] sm:$0xff]
        %v413 = vld [vmem:[%s335] sm:$0xff]
        %v414 = vld [vmem:[%s335 + $0x8] sm:$0xff]
        %v415 = vld [vmem:[%s344] sm:$0xff]
        %v416 = vld [vmem:[%s344 + $0x8] sm:$0xff]
        %p417 = scmp.eq.s32.totalorder %s31, 0
        %s418 = scalar_select %p417, 1, 0
        %v419 = vstv %s418
        %vm420 = vcmp.eq.s32.totalorder %v419, 1
        %v421 = vsel %vm420, 0.0, %v413
        %v422 = vsel %vm420, 0.0, %v414
        %p423 = scmp.eq.s32.totalorder %s31, 1
        %s424 = scalar_select %p423, 1, 0
        %v425 = vstv %s424
        %vm426 = vcmp.eq.s32.totalorder %v425, 1
        %v427 = vsel %vm426, 0.0, %v415
        %v428 = vsel %vm426, 0.0, %v416
        %v429 = vlaneseq
        %v430 = vshrl.u32 %v429, 7
        %v431 = vadd.s32 %v430, 8
        %v432 = vadd.s32 %v430, 16
        %v433 = vadd.s32 %v430, 24
        %v434 = vadd.s32 %v430, 32
        %v435 = vadd.s32 %v430, 40
        %v436 = vadd.s32 %v430, 48
        %v437 = vadd.s32 %v430, 56
        %v438 = vadd.s32 %v430, 64
        %v439 = vadd.s32 %v430, 72
        %v440 = vadd.s32 %v430, 80
        %v441 = vadd.s32 %v430, 88
        %v442 = vadd.s32 %v430, 96
        %v443 = vadd.s32 %v430, 104
        %v444 = vadd.s32 %v430, 112
        %v445 = vadd.s32 %v430, 120
        %v446 = vadd.s32 %v430, 128
        %v447 = vadd.s32 %v430, 136
        %v448 = vadd.s32 %v430, 144
        %v449 = vadd.s32 %v430, 152
        %vm450 = vcmp.lt.s32.totalorder %v430, 0
        %v451 = vsub.s32 0, %v430
        %v452 = vsel %vm450, %v451, %v430
        %v453 = vshrl.u32 %v452, 4
        %v454 = vand.u32 %v452, 15
        %v455 = vsub.s32 0, %v454
        %v456 = vsel %vm450, %v455, %v454
        %vm457 = vcmp.lt.s32.totalorder %v431, 0
        %v458 = vsub.s32 0, %v431
        %v459 = vsel %vm457, %v458, %v431
        %v460 = vshrl.u32 %v459, 4
        %v461 = vand.u32 %v459, 15
        %v462 = vsub.s32 0, %v461
        %v463 = vsel %vm457, %v462, %v461
        %vm464 = vcmp.lt.s32.totalorder %v432, 0
        %v465 = vsub.s32 0, %v432
        %v466 = vsel %vm464, %v465, %v432
        %v467 = vshrl.u32 %v466, 4
        %v468 = vand.u32 %v466, 15
        %v469 = vsub.s32 0, %v468
        %v470 = vsel %vm464, %v469, %v468
        %vm471 = vcmp.lt.s32.totalorder %v433, 0
        %v472 = vsub.s32 0, %v433
        %v473 = vsel %vm471, %v472, %v433
        %v474 = vshrl.u32 %v473, 4
        %v475 = vand.u32 %v473, 15
        %v476 = vsub.s32 0, %v475
        %v477 = vsel %vm471, %v476, %v475
        %vm478 = vcmp.lt.s32.totalorder %v434, 0
        %v479 = vsub.s32 0, %v434
        %v480 = vsel %vm478, %v479, %v434
        %v481 = vshrl.u32 %v480, 4
        %v482 = vand.u32 %v480, 15
        %v483 = vsub.s32 0, %v482
        %v484 = vsel %vm478, %v483, %v482
        %vm485 = vcmp.lt.s32.totalorder %v435, 0
        %v486 = vsub.s32 0, %v435
        %v487 = vsel %vm485, %v486, %v435
        %v488 = vshrl.u32 %v487, 4
        %v489 = vand.u32 %v487, 15
        %v490 = vsub.s32 0, %v489
        %v491 = vsel %vm485, %v490, %v489
        %vm492 = vcmp.lt.s32.totalorder %v436, 0
        %v493 = vsub.s32 0, %v436
        %v494 = vsel %vm492, %v493, %v436
        %v495 = vshrl.u32 %v494, 4
        %v496 = vand.u32 %v494, 15
        %v497 = vsub.s32 0, %v496
        %v498 = vsel %vm492, %v497, %v496
        %vm499 = vcmp.lt.s32.totalorder %v437, 0
        %v500 = vsub.s32 0, %v437
        %v501 = vsel %vm499, %v500, %v437
        %v502 = vshrl.u32 %v501, 4
        %v503 = vand.u32 %v501, 15
        %v504 = vsub.s32 0, %v503
        %v505 = vsel %vm499, %v504, %v503
        %vm506 = vcmp.lt.s32.totalorder %v438, 0
        %v507 = vsub.s32 0, %v438
        %v508 = vsel %vm506, %v507, %v438
        %v509 = vshrl.u32 %v508, 4
        %v510 = vand.u32 %v508, 15
        %v511 = vsub.s32 0, %v510
        %v512 = vsel %vm506, %v511, %v510
        %vm513 = vcmp.lt.s32.totalorder %v439, 0
        %v514 = vsub.s32 0, %v439
        %v515 = vsel %vm513, %v514, %v439
        %v516 = vshrl.u32 %v515, 4
        %v517 = vand.u32 %v515, 15
        %v518 = vsub.s32 0, %v517
        %v519 = vsel %vm513, %v518, %v517
        %vm520 = vcmp.lt.s32.totalorder %v440, 0
        %v521 = vsub.s32 0, %v440
        %v522 = vsel %vm520, %v521, %v440
        %v523 = vshrl.u32 %v522, 4
        %v524 = vand.u32 %v522, 15
        %v525 = vsub.s32 0, %v524
        %v526 = vsel %vm520, %v525, %v524
        %vm527 = vcmp.lt.s32.totalorder %v441, 0
        %v528 = vsub.s32 0, %v441
        %v529 = vsel %vm527, %v528, %v441
        %v530 = vshrl.u32 %v529, 4
        %v531 = vand.u32 %v529, 15
        %v532 = vsub.s32 0, %v531
        %v533 = vsel %vm527, %v532, %v531
        %vm534 = vcmp.lt.s32.totalorder %v442, 0
        %v535 = vsub.s32 0, %v442
        %v536 = vsel %vm534, %v535, %v442
        %v537 = vshrl.u32 %v536, 4
        %v538 = vand.u32 %v536, 15
        %v539 = vsub.s32 0, %v538
        %v540 = vsel %vm534, %v539, %v538
        %vm541 = vcmp.lt.s32.totalorder %v443, 0
        %v542 = vsub.s32 0, %v443
        %v543 = vsel %vm541, %v542, %v443
        %v544 = vshrl.u32 %v543, 4
        %v545 = vand.u32 %v543, 15
        %v546 = vsub.s32 0, %v545
        %v547 = vsel %vm541, %v546, %v545
        %vm548 = vcmp.lt.s32.totalorder %v444, 0
        %v549 = vsub.s32 0, %v444
        %v550 = vsel %vm548, %v549, %v444
        %v551 = vshrl.u32 %v550, 4
        %v552 = vand.u32 %v550, 15
        %v553 = vsub.s32 0, %v552
        %v554 = vsel %vm548, %v553, %v552
        %vm555 = vcmp.lt.s32.totalorder %v445, 0
        %v556 = vsub.s32 0, %v445
        %v557 = vsel %vm555, %v556, %v445
        %v558 = vshrl.u32 %v557, 4
        %v559 = vand.u32 %v557, 15
        %v560 = vsub.s32 0, %v559
        %v561 = vsel %vm555, %v560, %v559
        %vm562 = vcmp.lt.s32.totalorder %v446, 0
        %v563 = vsub.s32 0, %v446
        %v564 = vsel %vm562, %v563, %v446
        %v565 = vshrl.u32 %v564, 4
        %v566 = vand.u32 %v564, 15
        %v567 = vsub.s32 0, %v566
        %v568 = vsel %vm562, %v567, %v566
        %vm569 = vcmp.lt.s32.totalorder %v447, 0
        %v570 = vsub.s32 0, %v447
        %v571 = vsel %vm569, %v570, %v447
        %v572 = vshrl.u32 %v571, 4
        %v573 = vand.u32 %v571, 15
        %v574 = vsub.s32 0, %v573
        %v575 = vsel %vm569, %v574, %v573
        %vm576 = vcmp.lt.s32.totalorder %v448, 0
        %v577 = vsub.s32 0, %v448
        %v578 = vsel %vm576, %v577, %v448
        %v579 = vshrl.u32 %v578, 4
        %v580 = vand.u32 %v578, 15
        %v581 = vsub.s32 0, %v580
        %v582 = vsel %vm576, %v581, %v580
        %vm583 = vcmp.lt.s32.totalorder %v449, 0
        %v584 = vsub.s32 0, %v449
        %v585 = vsel %vm583, %v584, %v449
        %v586 = vshrl.u32 %v585, 4
        %v587 = vand.u32 %v585, 15
        %v588 = vsub.s32 0, %v587
        %v589 = vsel %vm583, %v588, %v587
        %vm590 = vcmp.ne.s32.totalorder %v456, 0
        %vm591 = vcmp.ne.s32.totalorder %v463, 0
        %vm592 = vcmp.ne.s32.totalorder %v470, 0
        %vm593 = vcmp.ne.s32.totalorder %v477, 0
        %vm594 = vcmp.ne.s32.totalorder %v484, 0
        %vm595 = vcmp.ne.s32.totalorder %v491, 0
        %vm596 = vcmp.ne.s32.totalorder %v498, 0
        %vm597 = vcmp.ne.s32.totalorder %v505, 0
        %vm598 = vcmp.ne.s32.totalorder %v512, 0
        %vm599 = vcmp.ne.s32.totalorder %v519, 0
        %vm600 = vcmp.ne.s32.totalorder %v526, 0
        %vm601 = vcmp.ne.s32.totalorder %v533, 0
        %vm602 = vcmp.ne.s32.totalorder %v540, 0
        %vm603 = vcmp.ne.s32.totalorder %v547, 0
        %vm604 = vcmp.ne.s32.totalorder %v554, 0
        %vm605 = vcmp.ne.s32.totalorder %v561, 0
        %vm606 = vcmp.ne.s32.totalorder %v568, 0
        %vm607 = vcmp.ne.s32.totalorder %v575, 0
        %vm608 = vcmp.ne.s32.totalorder %v582, 0
        %vm609 = vcmp.ne.s32.totalorder %v589, 0
        %vm610 = vcmp.lt.s32.totalorder %v456, 0
        %vm611 = vcmp.lt.s32.totalorder %v463, 0
        %vm612 = vcmp.lt.s32.totalorder %v470, 0
        %vm613 = vcmp.lt.s32.totalorder %v477, 0
        %vm614 = vcmp.lt.s32.totalorder %v484, 0
        %vm615 = vcmp.lt.s32.totalorder %v491, 0
        %vm616 = vcmp.lt.s32.totalorder %v498, 0
        %vm617 = vcmp.lt.s32.totalorder %v505, 0
        %vm618 = vcmp.lt.s32.totalorder %v512, 0
        %vm619 = vcmp.lt.s32.totalorder %v519, 0
        %vm620 = vcmp.lt.s32.totalorder %v526, 0
        %vm621 = vcmp.lt.s32.totalorder %v533, 0
        %vm622 = vcmp.lt.s32.totalorder %v540, 0
        %vm623 = vcmp.lt.s32.totalorder %v547, 0
        %vm624 = vcmp.lt.s32.totalorder %v554, 0
        %vm625 = vcmp.lt.s32.totalorder %v561, 0
        %vm626 = vcmp.lt.s32.totalorder %v568, 0
        %vm627 = vcmp.lt.s32.totalorder %v575, 0
        %vm628 = vcmp.lt.s32.totalorder %v582, 0
        %vm629 = vcmp.lt.s32.totalorder %v589, 0
        %vm630 = vmand %vm610, %vm590
        %vm631 = vmand %vm611, %vm591
        %vm632 = vmand %vm612, %vm592
        %vm633 = vmand %vm613, %vm593
        %vm634 = vmand %vm614, %vm594
        %vm635 = vmand %vm615, %vm595
        %vm636 = vmand %vm616, %vm596
        %vm637 = vmand %vm617, %vm597
        %vm638 = vmand %vm618, %vm598
        %vm639 = vmand %vm619, %vm599
        %vm640 = vmand %vm620, %vm600
        %vm641 = vmand %vm621, %vm601
        %vm642 = vmand %vm622, %vm602
        %vm643 = vmand %vm623, %vm603
        %vm644 = vmand %vm624, %vm604
        %vm645 = vmand %vm625, %vm605
        %vm646 = vmand %vm626, %vm606
        %vm647 = vmand %vm627, %vm607
        %vm648 = vmand %vm628, %vm608
        %vm649 = vmand %vm629, %vm609
        %v650 = vadd.s32 %v456, 16
        %v651 = vadd.s32 %v463, 16
        %v652 = vadd.s32 %v470, 16
        %v653 = vadd.s32 %v477, 16
        %v654 = vadd.s32 %v484, 16
        %v655 = vadd.s32 %v491, 16
        %v656 = vadd.s32 %v498, 16
        %v657 = vadd.s32 %v505, 16
        %v658 = vadd.s32 %v512, 16
        %v659 = vadd.s32 %v519, 16
        %v660 = vadd.s32 %v526, 16
        %v661 = vadd.s32 %v533, 16
        %v662 = vadd.s32 %v540, 16
        %v663 = vadd.s32 %v547, 16
        %v664 = vadd.s32 %v554, 16
        %v665 = vadd.s32 %v561, 16
        %v666 = vadd.s32 %v568, 16
        %v667 = vadd.s32 %v575, 16
        %v668 = vadd.s32 %v582, 16
        %v669 = vadd.s32 %v589, 16
        %v670 = vsel %vm630, %v650, %v456
        %v671 = vsel %vm631, %v651, %v463
        %v672 = vsel %vm632, %v652, %v470
        %v673 = vsel %vm633, %v653, %v477
        %v674 = vsel %vm634, %v654, %v484
        %v675 = vsel %vm635, %v655, %v491
        %v676 = vsel %vm636, %v656, %v498
        %v677 = vsel %vm637, %v657, %v505
        %v678 = vsel %vm638, %v658, %v512
        %v679 = vsel %vm639, %v659, %v519
        %v680 = vsel %vm640, %v660, %v526
        %v681 = vsel %vm641, %v661, %v533
        %v682 = vsel %vm642, %v662, %v540
        %v683 = vsel %vm643, %v663, %v547
        %v684 = vsel %vm644, %v664, %v554
        %v685 = vsel %vm645, %v665, %v561
        %v686 = vsel %vm646, %v666, %v568
        %v687 = vsel %vm647, %v667, %v575
        %v688 = vsel %vm648, %v668, %v582
        %v689 = vsel %vm649, %v669, %v589
        %vm690 = vcmp.gt.s32.totalorder %v670, 0
        %vm691 = vcmp.gt.s32.totalorder %v671, 0
        %vm692 = vcmp.gt.s32.totalorder %v672, 0
        %vm693 = vcmp.gt.s32.totalorder %v673, 0
        %vm694 = vcmp.gt.s32.totalorder %v674, 0
        %vm695 = vcmp.gt.s32.totalorder %v675, 0
        %vm696 = vcmp.gt.s32.totalorder %v676, 0
        %vm697 = vcmp.gt.s32.totalorder %v677, 0
        %vm698 = vcmp.gt.s32.totalorder %v678, 0
        %vm699 = vcmp.gt.s32.totalorder %v679, 0
        %vm700 = vcmp.gt.s32.totalorder %v680, 0
        %vm701 = vcmp.gt.s32.totalorder %v681, 0
        %vm702 = vcmp.gt.s32.totalorder %v682, 0
        %vm703 = vcmp.gt.s32.totalorder %v683, 0
        %vm704 = vcmp.gt.s32.totalorder %v684, 0
        %vm705 = vcmp.gt.s32.totalorder %v685, 0
        %vm706 = vcmp.gt.s32.totalorder %v686, 0
        %vm707 = vcmp.gt.s32.totalorder %v687, 0
        %vm708 = vcmp.gt.s32.totalorder %v688, 0
        %vm709 = vcmp.gt.s32.totalorder %v689, 0
        %v711 = vrot.slane %v428, 7
        %vm732 = vcmask 1040384
        %v733 = vrot.slane %v421, 7
        %v734 = vrot.slane %v422, 7
        %v735 = vsel %vm732, %v733, %v734
        %v736 = vrot.slane %v397, 7
        %v737 = vsel %vm732, %v734, %v736
        %v738 = vrot.slane %v398, 7
        %v739 = vsel %vm732, %v736, %v738
        %v740 = vrot.slane %v399, 7
        %v741 = vsel %vm732, %v738, %v740
        %v742 = vrot.slane %v400, 7
        %v743 = vsel %vm732, %v740, %v742
        %v744 = vrot.slane %v401, 7
        %v745 = vsel %vm732, %v742, %v744
        %v746 = vrot.slane %v402, 7
        %v747 = vsel %vm732, %v744, %v746
        %v748 = vrot.slane %v403, 7
        %v749 = vsel %vm732, %v746, %v748
        %v750 = vrot.slane %v404, 7
        %v751 = vsel %vm732, %v748, %v750
        %v752 = vrot.slane %v405, 7
        %v753 = vsel %vm732, %v750, %v752
        %v754 = vrot.slane %v406, 7
        %v755 = vsel %vm732, %v752, %v754
        %v756 = vrot.slane %v407, 7
        %v757 = vsel %vm732, %v754, %v756
        %v758 = vrot.slane %v408, 7
        %v759 = vsel %vm732, %v756, %v758
        %v760 = vrot.slane %v409, 7
        %v761 = vsel %vm732, %v758, %v760
        %v762 = vrot.slane %v410, 7
        %v763 = vsel %vm732, %v760, %v762
        %v764 = vrot.slane %v411, 7
        %v765 = vsel %vm732, %v762, %v764
        %v766 = vrot.slane %v412, 7
        %v767 = vsel %vm732, %v764, %v766
        %v768 = vrot.slane %v427, 7
        %v769 = vsel %vm732, %v766, %v768
        %v770 = vsel %vm732, %v768, %v711
        %v791 = vsel %vm732, %v711, %v733
        %v792 = vsel %vm690, 1, 0
        %v793 = vsel %vm691, 1, 0
        %v794 = vsel %vm692, 1, 0
        %v795 = vsel %vm693, 1, 0
        %v796 = vsel %vm694, 1, 0
        %v797 = vsel %vm695, 1, 0
        %v798 = vsel %vm696, 1, 0
        %v799 = vsel %vm697, 1, 0
        %v800 = vsel %vm698, 1, 0
        %v801 = vsel %vm699, 1, 0
        %v802 = vsel %vm700, 1, 0
        %v803 = vsel %vm701, 1, 0
        %v804 = vsel %vm702, 1, 0
        %v805 = vsel %vm703, 1, 0
        %v806 = vsel %vm704, 1, 0
        %v807 = vsel %vm705, 1, 0
        %v808 = vsel %vm706, 1, 0
        %v809 = vsel %vm707, 1, 0
        %v810 = vsel %vm708, 1, 0
        %v811 = vsel %vm709, 1, 0
        %vm812 = vcmp.eq.s32.totalorder %v792, 1
        %vm813 = vcmp.eq.s32.totalorder %v793, 1
        %vm814 = vcmp.eq.s32.totalorder %v794, 1
        %vm815 = vcmp.eq.s32.totalorder %v795, 1
        %vm816 = vcmp.eq.s32.totalorder %v796, 1
        %vm817 = vcmp.eq.s32.totalorder %v797, 1
        %vm818 = vcmp.eq.s32.totalorder %v798, 1
        %vm819 = vcmp.eq.s32.totalorder %v799, 1
        %vm820 = vcmp.eq.s32.totalorder %v800, 1
        %vm821 = vcmp.eq.s32.totalorder %v801, 1
        %vm822 = vcmp.eq.s32.totalorder %v802, 1
        %vm823 = vcmp.eq.s32.totalorder %v803, 1
        %vm824 = vcmp.eq.s32.totalorder %v804, 1
        %vm825 = vcmp.eq.s32.totalorder %v805, 1
        %vm826 = vcmp.eq.s32.totalorder %v806, 1
        %vm827 = vcmp.eq.s32.totalorder %v807, 1
        %vm828 = vcmp.eq.s32.totalorder %v808, 1
        %vm829 = vcmp.eq.s32.totalorder %v809, 1
        %vm830 = vcmp.eq.s32.totalorder %v810, 1
        %vm831 = vcmp.eq.s32.totalorder %v811, 1
        %v832 = vsel %vm812, %v791, 0.0
        %v833 = vsel %vm813, %v735, 0.0
        %v834 = vsel %vm814, %v737, 0.0
        %v835 = vsel %vm815, %v739, 0.0
        %v836 = vsel %vm816, %v741, 0.0
        %v837 = vsel %vm817, %v743, 0.0
        %v838 = vsel %vm818, %v745, 0.0
        %v839 = vsel %vm819, %v747, 0.0
        %v840 = vsel %vm820, %v749, 0.0
        %v841 = vsel %vm821, %v751, 0.0
        %v842 = vsel %vm822, %v753, 0.0
        %v843 = vsel %vm823, %v755, 0.0
        %v844 = vsel %vm824, %v757, 0.0
        %v845 = vsel %vm825, %v759, 0.0
        %v846 = vsel %vm826, %v761, 0.0
        %v847 = vsel %vm827, %v763, 0.0
        %v848 = vsel %vm828, %v765, 0.0
        %v849 = vsel %vm829, %v767, 0.0
        %v850 = vsel %vm830, %v769, 0.0
        %v851 = vsel %vm831, %v770, 0.0
        %vm852 = vcmp.lt.s32.totalorder %v670, 15
        %vm853 = vcmp.lt.s32.totalorder %v671, 15
        %vm854 = vcmp.lt.s32.totalorder %v672, 15
        %vm855 = vcmp.lt.s32.totalorder %v673, 15
        %vm856 = vcmp.lt.s32.totalorder %v674, 15
        %vm857 = vcmp.lt.s32.totalorder %v675, 15
        %vm858 = vcmp.lt.s32.totalorder %v676, 15
        %vm859 = vcmp.lt.s32.totalorder %v677, 15
        %vm860 = vcmp.lt.s32.totalorder %v678, 15
        %vm861 = vcmp.lt.s32.totalorder %v679, 15
        %vm862 = vcmp.lt.s32.totalorder %v680, 15
        %vm863 = vcmp.lt.s32.totalorder %v681, 15
        %vm864 = vcmp.lt.s32.totalorder %v682, 15
        %vm865 = vcmp.lt.s32.totalorder %v683, 15
        %vm866 = vcmp.lt.s32.totalorder %v684, 15
        %vm867 = vcmp.lt.s32.totalorder %v685, 15
        %vm868 = vcmp.lt.s32.totalorder %v686, 15
        %vm869 = vcmp.lt.s32.totalorder %v687, 15
        %vm870 = vcmp.lt.s32.totalorder %v688, 15
        %vm871 = vcmp.lt.s32.totalorder %v689, 15
        %vm872 = vcmask 1046528
        %v873 = vrot.slane %v421, 1
        %v874 = vrot.slane %v422, 1
        %v875 = vsel %vm872, %v873, %v874
        %v876 = vrot.slane %v397, 1
        %v877 = vsel %vm872, %v874, %v876
        %v878 = vrot.slane %v398, 1
        %v879 = vsel %vm872, %v876, %v878
        %v880 = vrot.slane %v399, 1
        %v881 = vsel %vm872, %v878, %v880
        %v882 = vrot.slane %v400, 1
        %v883 = vsel %vm872, %v880, %v882
        %v884 = vrot.slane %v401, 1
        %v885 = vsel %vm872, %v882, %v884
        %v886 = vrot.slane %v402, 1
        %v887 = vsel %vm872, %v884, %v886
        %v888 = vrot.slane %v403, 1
        %v889 = vsel %vm872, %v886, %v888
        %v890 = vrot.slane %v404, 1
        %v891 = vsel %vm872, %v888, %v890
        %v892 = vrot.slane %v405, 1
        %v893 = vsel %vm872, %v890, %v892
        %v894 = vrot.slane %v406, 1
        %v895 = vsel %vm872, %v892, %v894
        %v896 = vrot.slane %v407, 1
        %v897 = vsel %vm872, %v894, %v896
        %v898 = vrot.slane %v408, 1
        %v899 = vsel %vm872, %v896, %v898
        %v900 = vrot.slane %v409, 1
        %v901 = vsel %vm872, %v898, %v900
        %v902 = vrot.slane %v410, 1
        %v903 = vsel %vm872, %v900, %v902
        %v904 = vrot.slane %v411, 1
        %v905 = vsel %vm872, %v902, %v904
        %v906 = vrot.slane %v412, 1
        %v907 = vsel %vm872, %v904, %v906
        %v908 = vrot.slane %v427, 1
        %v909 = vsel %vm872, %v906, %v908
        %v910 = vrot.slane %v428, 1
        %v911 = vsel %vm872, %v908, %v910
        %v933 = vsel %vm872, %v910, %v873
        %v934 = vsel %vm852, 1, 0
        %v935 = vsel %vm853, 1, 0
        %v936 = vsel %vm854, 1, 0
        %v937 = vsel %vm855, 1, 0
        %v938 = vsel %vm856, 1, 0
        %v939 = vsel %vm857, 1, 0
        %v940 = vsel %vm858, 1, 0
        %v941 = vsel %vm859, 1, 0
        %v942 = vsel %vm860, 1, 0
        %v943 = vsel %vm861, 1, 0
        %v944 = vsel %vm862, 1, 0
        %v945 = vsel %vm863, 1, 0
        %v946 = vsel %vm864, 1, 0
        %v947 = vsel %vm865, 1, 0
        %v948 = vsel %vm866, 1, 0
        %v949 = vsel %vm867, 1, 0
        %v950 = vsel %vm868, 1, 0
        %v951 = vsel %vm869, 1, 0
        %v952 = vsel %vm870, 1, 0
        %v953 = vsel %vm871, 1, 0
        %vm954 = vcmp.eq.s32.totalorder %v934, 1
        %vm955 = vcmp.eq.s32.totalorder %v935, 1
        %vm956 = vcmp.eq.s32.totalorder %v936, 1
        %vm957 = vcmp.eq.s32.totalorder %v937, 1
        %vm958 = vcmp.eq.s32.totalorder %v938, 1
        %vm959 = vcmp.eq.s32.totalorder %v939, 1
        %vm960 = vcmp.eq.s32.totalorder %v940, 1
        %vm961 = vcmp.eq.s32.totalorder %v941, 1
        %vm962 = vcmp.eq.s32.totalorder %v942, 1
        %vm963 = vcmp.eq.s32.totalorder %v943, 1
        %vm964 = vcmp.eq.s32.totalorder %v944, 1
        %vm965 = vcmp.eq.s32.totalorder %v945, 1
        %vm966 = vcmp.eq.s32.totalorder %v946, 1
        %vm967 = vcmp.eq.s32.totalorder %v947, 1
        %vm968 = vcmp.eq.s32.totalorder %v948, 1
        %vm969 = vcmp.eq.s32.totalorder %v949, 1
        %vm970 = vcmp.eq.s32.totalorder %v950, 1
        %vm971 = vcmp.eq.s32.totalorder %v951, 1
        %vm972 = vcmp.eq.s32.totalorder %v952, 1
        %vm973 = vcmp.eq.s32.totalorder %v953, 1
        %v974 = vsel %vm954, %v875, 0.0
        %v975 = vsel %vm955, %v877, 0.0
        %v976 = vsel %vm956, %v879, 0.0
        %v977 = vsel %vm957, %v881, 0.0
        %v978 = vsel %vm958, %v883, 0.0
        %v979 = vsel %vm959, %v885, 0.0
        %v980 = vsel %vm960, %v887, 0.0
        %v981 = vsel %vm961, %v889, 0.0
        %v982 = vsel %vm962, %v891, 0.0
        %v983 = vsel %vm963, %v893, 0.0
        %v984 = vsel %vm964, %v895, 0.0
        %v985 = vsel %vm965, %v897, 0.0
        %v986 = vsel %vm966, %v899, 0.0
        %v987 = vsel %vm967, %v901, 0.0
        %v988 = vsel %vm968, %v903, 0.0
        %v989 = vsel %vm969, %v905, 0.0
        %v990 = vsel %vm970, %v907, 0.0
        %v991 = vsel %vm971, %v909, 0.0
        %v992 = vsel %vm972, %v911, 0.0
        %v993 = vsel %vm973, %v933, 0.0
        %v994 = vld [vmem:[#allocation8] sm:$0xff]
        %v995 = vld [vmem:[#allocation8 + $0x8] sm:$0x1]
        %v996 = vld [vmem:[%s4] sm:$0x1]
        %v997 = vlaneseq
        %v998 = vshrl.u32 %v997, 7
        %v999 = vsub.s32 0, %v998
        %v1000 = vrot.slane %v994, %v999
        %v1001 = vmul.f32 %v832, %v1000
        %v1002 = vmul.f32 %v833, %v1000
        %v1003 = vmul.f32 %v834, %v1000
        %v1004 = vmul.f32 %v835, %v1000
        %v1005 = vmul.f32 %v836, %v1000
        %v1006 = vmul.f32 %v837, %v1000
        %v1007 = vmul.f32 %v838, %v1000
        %v1008 = vmul.f32 %v839, %v1000
        %v1009 = vmul.f32 %v840, %v1000
        %v1010 = vmul.f32 %v841, %v1000
        %v1011 = vmul.f32 %v842, %v1000
        %v1012 = vmul.f32 %v843, %v1000
        %v1013 = vmul.f32 %v844, %v1000
        %v1014 = vmul.f32 %v845, %v1000
        %v1015 = vmul.f32 %v846, %v1000
        %v1016 = vmul.f32 %v847, %v1000
        %v1018 = vlaneseq
        %v1019 = vshrl.u32 %v1018, 7
        %v1020 = vsub.s32 0, %v1019
        %v1021 = vrot.slane %v996, %v1020
        %v1023 = vadd.f32 %v1001, %v1021
        %v1024 = vadd.f32 %v1002, %v1021
        %v1025 = vadd.f32 %v1003, %v1021
        %v1026 = vadd.f32 %v1004, %v1021
        %v1027 = vadd.f32 %v1005, %v1021
        %v1028 = vadd.f32 %v1006, %v1021
        %v1029 = vadd.f32 %v1007, %v1021
        %v1030 = vadd.f32 %v1008, %v1021
        %v1031 = vadd.f32 %v1009, %v1021
        %v1032 = vadd.f32 %v1010, %v1021
        %v1033 = vadd.f32 %v1011, %v1021
        %v1034 = vadd.f32 %v1012, %v1021
        %v1035 = vadd.f32 %v1013, %v1021
        %v1036 = vadd.f32 %v1014, %v1021
        %v1037 = vadd.f32 %v1015, %v1021
        %v1038 = vadd.f32 %v1016, %v1021
        %v1039 = vlaneseq
        %v1040 = vshrl.u32 %v1039, 7
        %v1041 = vsub.s32 1, %v1040
        %v1042 = vrot.slane %v994, %v1041
        %v1043 = vmul.f32 %v421, %v1042
        %v1044 = vmul.f32 %v422, %v1042
        %v1045 = vmul.f32 %v397, %v1042
        %v1046 = vmul.f32 %v398, %v1042
        %v1047 = vmul.f32 %v399, %v1042
        %v1048 = vmul.f32 %v400, %v1042
        %v1049 = vmul.f32 %v401, %v1042
        %v1050 = vmul.f32 %v402, %v1042
        %v1051 = vmul.f32 %v403, %v1042
        %v1052 = vmul.f32 %v404, %v1042
        %v1053 = vmul.f32 %v405, %v1042
        %v1054 = vmul.f32 %v406, %v1042
        %v1055 = vmul.f32 %v407, %v1042
        %v1056 = vmul.f32 %v408, %v1042
        %v1057 = vmul.f32 %v409, %v1042
        %v1058 = vmul.f32 %v410, %v1042
        %v1059 = vadd.f32 %v1023, %v1043
        %v1060 = vadd.f32 %v1024, %v1044
        %v1061 = vadd.f32 %v1025, %v1045
        %v1062 = vadd.f32 %v1026, %v1046
        %v1063 = vadd.f32 %v1027, %v1047
        %v1064 = vadd.f32 %v1028, %v1048
        %v1065 = vadd.f32 %v1029, %v1049
        %v1066 = vadd.f32 %v1030, %v1050
        %v1067 = vadd.f32 %v1031, %v1051
        %v1068 = vadd.f32 %v1032, %v1052
        %v1069 = vadd.f32 %v1033, %v1053
        %v1070 = vadd.f32 %v1034, %v1054
        %v1071 = vadd.f32 %v1035, %v1055
        %v1072 = vadd.f32 %v1036, %v1056
        %v1073 = vadd.f32 %v1037, %v1057
        %v1074 = vadd.f32 %v1038, %v1058
        %v1075 = vlaneseq
        %v1076 = vshrl.u32 %v1075, 7
        %v1077 = vsub.s32 2, %v1076
        %v1078 = vrot.slane %v994, %v1077
        %v1079 = vmul.f32 %v974, %v1078
        %v1080 = vmul.f32 %v975, %v1078
        %v1081 = vmul.f32 %v976, %v1078
        %v1082 = vmul.f32 %v977, %v1078
        %v1083 = vmul.f32 %v978, %v1078
        %v1084 = vmul.f32 %v979, %v1078
        %v1085 = vmul.f32 %v980, %v1078
        %v1086 = vmul.f32 %v981, %v1078
        %v1087 = vmul.f32 %v982, %v1078
        %v1088 = vmul.f32 %v983, %v1078
        %v1089 = vmul.f32 %v984, %v1078
        %v1090 = vmul.f32 %v985, %v1078
        %v1091 = vmul.f32 %v986, %v1078
        %v1092 = vmul.f32 %v987, %v1078
        %v1093 = vmul.f32 %v988, %v1078
        %v1094 = vmul.f32 %v989, %v1078
        %v1095 = vadd.f32 %v1059, %v1079
        %v1096 = vadd.f32 %v1060, %v1080
        %v1097 = vadd.f32 %v1061, %v1081
        %v1098 = vadd.f32 %v1062, %v1082
        %v1099 = vadd.f32 %v1063, %v1083
        %v1100 = vadd.f32 %v1064, %v1084
        %v1101 = vadd.f32 %v1065, %v1085
        %v1102 = vadd.f32 %v1066, %v1086
        %v1103 = vadd.f32 %v1067, %v1087
        %v1104 = vadd.f32 %v1068, %v1088
        %v1105 = vadd.f32 %v1069, %v1089
        %v1106 = vadd.f32 %v1070, %v1090
        %v1107 = vadd.f32 %v1071, %v1091
        %v1108 = vadd.f32 %v1072, %v1092
        %v1109 = vadd.f32 %v1073, %v1093
        %v1110 = vadd.f32 %v1074, %v1094
        %v1111 = vlaneseq
        %v1112 = vshrl.u32 %v1111, 7
        %v1113 = vsub.s32 3, %v1112
        %v1114 = vrot.slane %v994, %v1113
        %v1115 = vmul.f32 %v834, %v1114
        %v1116 = vmul.f32 %v835, %v1114
        %v1117 = vmul.f32 %v836, %v1114
        %v1118 = vmul.f32 %v837, %v1114
        %v1119 = vmul.f32 %v838, %v1114
        %v1120 = vmul.f32 %v839, %v1114
        %v1121 = vmul.f32 %v840, %v1114
        %v1122 = vmul.f32 %v841, %v1114
        %v1123 = vmul.f32 %v842, %v1114
        %v1124 = vmul.f32 %v843, %v1114
        %v1125 = vmul.f32 %v844, %v1114
        %v1126 = vmul.f32 %v845, %v1114
        %v1127 = vmul.f32 %v846, %v1114
        %v1128 = vmul.f32 %v847, %v1114
        %v1129 = vmul.f32 %v848, %v1114
        %v1130 = vmul.f32 %v849, %v1114
        %v1131 = vadd.f32 %v1095, %v1115
        %v1132 = vadd.f32 %v1096, %v1116
        %v1133 = vadd.f32 %v1097, %v1117
        %v1134 = vadd.f32 %v1098, %v1118
        %v1135 = vadd.f32 %v1099, %v1119
        %v1136 = vadd.f32 %v1100, %v1120
        %v1137 = vadd.f32 %v1101, %v1121
        %v1138 = vadd.f32 %v1102, %v1122
        %v1139 = vadd.f32 %v1103, %v1123
        %v1140 = vadd.f32 %v1104, %v1124
        %v1141 = vadd.f32 %v1105, %v1125
        %v1142 = vadd.f32 %v1106, %v1126
        %v1143 = vadd.f32 %v1107, %v1127
        %v1144 = vadd.f32 %v1108, %v1128
        %v1145 = vadd.f32 %v1109, %v1129
        %v1146 = vadd.f32 %v1110, %v1130
        %v1147 = vlaneseq
        %v1148 = vshrl.u32 %v1147, 7
        %v1149 = vsub.s32 4, %v1148
        %v1150 = vrot.slane %v994, %v1149
        %v1151 = vmul.f32 %v397, %v1150
        %v1152 = vmul.f32 %v398, %v1150
        %v1153 = vmul.f32 %v399, %v1150
        %v1154 = vmul.f32 %v400, %v1150
        %v1155 = vmul.f32 %v401, %v1150
        %v1156 = vmul.f32 %v402, %v1150
        %v1157 = vmul.f32 %v403, %v1150
        %v1158 = vmul.f32 %v404, %v1150
        %v1159 = vmul.f32 %v405, %v1150
        %v1160 = vmul.f32 %v406, %v1150
        %v1161 = vmul.f32 %v407, %v1150
        %v1162 = vmul.f32 %v408, %v1150
        %v1163 = vmul.f32 %v409, %v1150
        %v1164 = vmul.f32 %v410, %v1150
        %v1165 = vmul.f32 %v411, %v1150
        %v1166 = vmul.f32 %v412, %v1150
        %v1167 = vadd.f32 %v1131, %v1151
        %v1168 = vadd.f32 %v1132, %v1152
        %v1169 = vadd.f32 %v1133, %v1153
        %v1170 = vadd.f32 %v1134, %v1154
        %v1171 = vadd.f32 %v1135, %v1155
        %v1172 = vadd.f32 %v1136, %v1156
        %v1173 = vadd.f32 %v1137, %v1157
        %v1174 = vadd.f32 %v1138, %v1158
        %v1175 = vadd.f32 %v1139, %v1159
        %v1176 = vadd.f32 %v1140, %v1160
        %v1177 = vadd.f32 %v1141, %v1161
        %v1178 = vadd.f32 %v1142, %v1162
        %v1179 = vadd.f32 %v1143, %v1163
        %v1180 = vadd.f32 %v1144, %v1164
        %v1181 = vadd.f32 %v1145, %v1165
        %v1182 = vadd.f32 %v1146, %v1166
        %v1183 = vlaneseq
        %v1184 = vshrl.u32 %v1183, 7
        %v1185 = vsub.s32 5, %v1184
        %v1186 = vrot.slane %v994, %v1185
        %v1187 = vmul.f32 %v976, %v1186
        %v1188 = vmul.f32 %v977, %v1186
        %v1189 = vmul.f32 %v978, %v1186
        %v1190 = vmul.f32 %v979, %v1186
        %v1191 = vmul.f32 %v980, %v1186
        %v1192 = vmul.f32 %v981, %v1186
        %v1193 = vmul.f32 %v982, %v1186
        %v1194 = vmul.f32 %v983, %v1186
        %v1195 = vmul.f32 %v984, %v1186
        %v1196 = vmul.f32 %v985, %v1186
        %v1197 = vmul.f32 %v986, %v1186
        %v1198 = vmul.f32 %v987, %v1186
        %v1199 = vmul.f32 %v988, %v1186
        %v1200 = vmul.f32 %v989, %v1186
        %v1201 = vmul.f32 %v990, %v1186
        %v1202 = vmul.f32 %v991, %v1186
        %v1203 = vadd.f32 %v1167, %v1187
        %v1204 = vadd.f32 %v1168, %v1188
        %v1205 = vadd.f32 %v1169, %v1189
        %v1206 = vadd.f32 %v1170, %v1190
        %v1207 = vadd.f32 %v1171, %v1191
        %v1208 = vadd.f32 %v1172, %v1192
        %v1209 = vadd.f32 %v1173, %v1193
        %v1210 = vadd.f32 %v1174, %v1194
        %v1211 = vadd.f32 %v1175, %v1195
        %v1212 = vadd.f32 %v1176, %v1196
        %v1213 = vadd.f32 %v1177, %v1197
        %v1214 = vadd.f32 %v1178, %v1198
        %v1215 = vadd.f32 %v1179, %v1199
        %v1216 = vadd.f32 %v1180, %v1200
        %v1217 = vadd.f32 %v1181, %v1201
        %v1218 = vadd.f32 %v1182, %v1202
        %v1219 = vlaneseq
        %v1220 = vshrl.u32 %v1219, 7
        %v1221 = vsub.s32 6, %v1220
        %v1222 = vrot.slane %v994, %v1221
        %v1223 = vmul.f32 %v836, %v1222
        %v1224 = vmul.f32 %v837, %v1222
        %v1225 = vmul.f32 %v838, %v1222
        %v1226 = vmul.f32 %v839, %v1222
        %v1227 = vmul.f32 %v840, %v1222
        %v1228 = vmul.f32 %v841, %v1222
        %v1229 = vmul.f32 %v842, %v1222
        %v1230 = vmul.f32 %v843, %v1222
        %v1231 = vmul.f32 %v844, %v1222
        %v1232 = vmul.f32 %v845, %v1222
        %v1233 = vmul.f32 %v846, %v1222
        %v1234 = vmul.f32 %v847, %v1222
        %v1235 = vmul.f32 %v848, %v1222
        %v1236 = vmul.f32 %v849, %v1222
        %v1237 = vmul.f32 %v850, %v1222
        %v1238 = vmul.f32 %v851, %v1222
        %v1239 = vadd.f32 %v1203, %v1223
        %v1240 = vadd.f32 %v1204, %v1224
        %v1241 = vadd.f32 %v1205, %v1225
        %v1242 = vadd.f32 %v1206, %v1226
        %v1243 = vadd.f32 %v1207, %v1227
        %v1244 = vadd.f32 %v1208, %v1228
        %v1245 = vadd.f32 %v1209, %v1229
        %v1246 = vadd.f32 %v1210, %v1230
        %v1247 = vadd.f32 %v1211, %v1231
        %v1248 = vadd.f32 %v1212, %v1232
        %v1249 = vadd.f32 %v1213, %v1233
        %v1250 = vadd.f32 %v1214, %v1234
        %v1251 = vadd.f32 %v1215, %v1235
        %v1252 = vadd.f32 %v1216, %v1236
        %v1253 = vadd.f32 %v1217, %v1237
        %v1254 = vadd.f32 %v1218, %v1238
        %v1255 = vlaneseq
        %v1256 = vshrl.u32 %v1255, 7
        %v1257 = vsub.s32 7, %v1256
        %v1258 = vrot.slane %v994, %v1257
        %v1259 = vmul.f32 %v399, %v1258
        %v1260 = vmul.f32 %v400, %v1258
        %v1261 = vmul.f32 %v401, %v1258
        %v1262 = vmul.f32 %v402, %v1258
        %v1263 = vmul.f32 %v403, %v1258
        %v1264 = vmul.f32 %v404, %v1258
        %v1265 = vmul.f32 %v405, %v1258
        %v1266 = vmul.f32 %v406, %v1258
        %v1267 = vmul.f32 %v407, %v1258
        %v1268 = vmul.f32 %v408, %v1258
        %v1269 = vmul.f32 %v409, %v1258
        %v1270 = vmul.f32 %v410, %v1258
        %v1271 = vmul.f32 %v411, %v1258
        %v1272 = vmul.f32 %v412, %v1258
        %v1273 = vmul.f32 %v427, %v1258
        %v1274 = vmul.f32 %v428, %v1258
        %v1275 = vadd.f32 %v1239, %v1259
        %v1276 = vadd.f32 %v1240, %v1260
        %v1277 = vadd.f32 %v1241, %v1261
        %v1278 = vadd.f32 %v1242, %v1262
        %v1279 = vadd.f32 %v1243, %v1263
        %v1280 = vadd.f32 %v1244, %v1264
        %v1281 = vadd.f32 %v1245, %v1265
        %v1282 = vadd.f32 %v1246, %v1266
        %v1283 = vadd.f32 %v1247, %v1267
        %v1284 = vadd.f32 %v1248, %v1268
        %v1285 = vadd.f32 %v1249, %v1269
        %v1286 = vadd.f32 %v1250, %v1270
        %v1287 = vadd.f32 %v1251, %v1271
        %v1288 = vadd.f32 %v1252, %v1272
        %v1289 = vadd.f32 %v1253, %v1273
        %v1290 = vadd.f32 %v1254, %v1274
        %v1291 = vlaneseq
        %v1292 = vshrl.u32 %v1291, 7
        %v1293 = vsub.s32 0, %v1292
        %v1294 = vrot.slane %v995, %v1293
        %v1295 = vmul.f32 %v978, %v1294
        %v1296 = vmul.f32 %v979, %v1294
        %v1297 = vmul.f32 %v980, %v1294
        %v1298 = vmul.f32 %v981, %v1294
        %v1299 = vmul.f32 %v982, %v1294
        %v1300 = vmul.f32 %v983, %v1294
        %v1301 = vmul.f32 %v984, %v1294
        %v1302 = vmul.f32 %v985, %v1294
        %v1303 = vmul.f32 %v986, %v1294
        %v1304 = vmul.f32 %v987, %v1294
        %v1305 = vmul.f32 %v988, %v1294
        %v1306 = vmul.f32 %v989, %v1294
        %v1307 = vmul.f32 %v990, %v1294
        %v1308 = vmul.f32 %v991, %v1294
        %v1309 = vmul.f32 %v992, %v1294
        %v1310 = vmul.f32 %v993, %v1294
        %v1311 = vadd.f32 %v1275, %v1295
        %v1312 = vadd.f32 %v1276, %v1296
        %v1313 = vadd.f32 %v1277, %v1297
        %v1314 = vadd.f32 %v1278, %v1298
        %v1315 = vadd.f32 %v1279, %v1299
        %v1316 = vadd.f32 %v1280, %v1300
        %v1317 = vadd.f32 %v1281, %v1301
        %v1318 = vadd.f32 %v1282, %v1302
        %v1319 = vadd.f32 %v1283, %v1303
        %v1320 = vadd.f32 %v1284, %v1304
        %v1321 = vadd.f32 %v1285, %v1305
        %v1322 = vadd.f32 %v1286, %v1306
        %v1323 = vadd.f32 %v1287, %v1307
        %v1324 = vadd.f32 %v1288, %v1308
        %v1325 = vadd.f32 %v1289, %v1309
        %v1326 = vadd.f32 %v1290, %v1310
        %1327 = vst [vmem:[%s384] sm:$0xff] %v1311
        %1328 = vst [vmem:[%s384 + $0x8] sm:$0xff] %v1312
        %1329 = vst [vmem:[%s384 + $0x10] sm:$0xff] %v1313
        %1330 = vst [vmem:[%s384 + $0x18] sm:$0xff] %v1314
        %1331 = vst [vmem:[%s384 + $0x20] sm:$0xff] %v1315
        %1332 = vst [vmem:[%s384 + $0x28] sm:$0xff] %v1316
        %1333 = vst [vmem:[%s384 + $0x30] sm:$0xff] %v1317
        %1334 = vst [vmem:[%s384 + $0x38] sm:$0xff] %v1318
        %1335 = vst [vmem:[%s384 + $0x40] sm:$0xff] %v1319
        %1336 = vst [vmem:[%s384 + $0x48] sm:$0xff] %v1320
        %1337 = vst [vmem:[%s384 + $0x50] sm:$0xff] %v1321
        %1338 = vst [vmem:[%s384 + $0x58] sm:$0xff] %v1322
        %1339 = vst [vmem:[%s384 + $0x60] sm:$0xff] %v1323
        %1340 = vst [vmem:[%s384 + $0x68] sm:$0xff] %v1324
        %1341 = vst [vmem:[%s384 + $0x70] sm:$0xff] %v1325
        %1342 = vst [vmem:[%s384 + $0x78] sm:$0xff] %v1326
        %s1343 = sand.u32 %s190, 1
        %s1344 = scalar_lea.sflag [#allocation4], %s1343
        %s1345 = sand.u32 %s190, 1
        %s1346 = smul.addr %s1345, 128
        %s1347 = scalar_lea.vmem [#allocation10], %s1346
        // Predicated region
        $region57: #{tpu_custom_call.1} parent=39 // pred_check
          %p1348 = pneg %p200
        $region58: #{tpu_custom_call.1} parent=39 // pred_check_branch
          %1350 = sbr.rel (%p1348) target = $region60
        $region59: #{tpu_custom_call.1} parent=39 // pred_region
          %s1351 = smul.u32 16, %s31
          %s1353 = ssub.s32 2048, 2048
          %1354 = vsyncadd %s1344, %s1353
          %s1355 = smul.addr %s30, 32
          %s1356 = sadd.s32 %s1351, %s1355
          %s1357 = smul.addr %s1356, 128
          %s1358 = scalar_lea.hbm %s5, %s1357
          %s1359 = sshll.u32 %s1347, 4
          %s1360 = int_to_ptr.vmem [resolvable:$true] %s1359
          %1365 = dma.vmem_to_hbm [thread:$0]  %s1360, 2048, %s1358, %s1344, 128, 128, 8
        $region60: #{tpu_custom_call.1} parent=39 // pred_fallthru
          _
      $region40: #{tpu_custom_call.1} parent=5 // pred_fallthru
        _
      %p1366 = scmp.le.s32.totalorder 2, %s21
      // Predicated region
      $region61: #{tpu_custom_call.1} parent=5 // pred_check
        %p1367 = pneg %p1366
      $region62: #{tpu_custom_call.1} parent=5 // pred_check_branch
        %1369 = sbr.rel (%p1367) target = $region64
      $region63: #{tpu_custom_call.1} parent=5 // pred_region
        %s1370 = ssub.s32 %s21, 2
        // Predicated region
        $region65: #{tpu_custom_call.1} parent=63 // pred_check
          %p1371 = pneg %p206
        $region66: #{tpu_custom_call.1} parent=63 // pred_check_branch
          %1373 = sbr.rel (%p1371) target = $region68
        $region67: #{tpu_custom_call.1} parent=63 // pred_region
          %s1374 = sand.u32 %s191, 1
          %s1375 = scalar_lea.sflag [#allocation4], %s1374
          %s1376 = sand.u32 %s191, 1
          %s1377 = smul.addr %s1376, 128
          %s1378 = scalar_lea.vmem [#allocation10], %s1377
          %1379 = dma.done %s1375, 2048
        $region68: #{tpu_custom_call.1} parent=63 // pred_fallthru
          _
      $region64: #{tpu_custom_call.1} parent=5 // pred_fallthru
        _
    $region6: #{tpu_custom_call.1} parent=1 // loop_footer
      %s25 = sadd.s32 1, %s21
    $region7: #{tpu_custom_call.1} parent=1 // loop_footer_branch
      %20 = sbr.rel target = $region3
    $region8: #{tpu_custom_call.1} parent=1 // loop_exit
      _
    %1380 = vsyncpa [#allocation3], 1
    %s1381 = scalar_lea.sflag [#allocation3], 1
    %1382 = vsyncpa %s1381, 1
    %1383 = vsyncpa [#allocation6], 1
    %s1384 = scalar_lea.sflag [#allocation6], 1
    %1385 = vsyncpa %s1384, 1
    %1386 = vsyncpa [#allocation9], 1
    %1387 = vsyncpa [#allocation4], 1
    %s1388 = scalar_lea.sflag [#allocation4], 1
    %1389 = vsyncpa %s1388, 1

</llo_original>
